<compile_context>
chip_gen: v7x
topology: tpu7x:2x2x1
jax: 0.10.0
libtpu: 0.0.40
codegen_flags: <defaults>
</compile_context>

<pallas_src>
import functools

import jax
import jax.numpy as jnp
from jax import lax
from jax.experimental import pallas as pl
from jax.experimental.pallas import tpu as pltpu

_LANE = 128
_SUBLANE = 8


def _round_up(x, m):
    return (x + m - 1) // m * m


def _gru_recurrence_kernel(gi_ref, h0_ref, bhn_ref, whhT_hbm, hs_ref, h_scr, whh_scr):
    """One grid step == one (batch tile, time chunk).

    gi_ref   : (T_CHUNK, B_TILE, 3*Hp)  precomputed input projection (+ folded biases)
    h0_ref   : (1, B_TILE, Hp)          initial hidden state for this batch tile
    bhn_ref  : (1, Hp)                  hidden bias of the n gate (applied before r*)
    whhT_hbm : (Hp, 3*Hp)               pre-transposed GRU hidden weights, left in HBM
    hs_ref   : (T_CHUNK, B_TILE, Hp)    hidden state at every step (output)
    h_scr    : (B_TILE, Hp)             VMEM scratch carrying h across time chunks
    whh_scr  : (Hp, 3*Hp)               VMEM scratch holding W_hh^T (staged once)
    """
    c = pl.program_id(1)               # time-chunk axis (sequential, "arbitrary")

    @pl.when(c == 0)
    def _():
        # New batch tile: stage the weights (single VMEM copy, not double-buffered by
        # the pipeline) and (re)load the initial hidden state for this tile.
        pltpu.sync_copy(whhT_hbm, whh_scr)
        h_scr[...] = h0_ref[0]

    whh_t = whh_scr[...]                               # (Hp, 3Hp) loaded once per chunk
    b_tile, hdim = h_scr.shape
    # Hoisted out of the unrolled time loop (JAX does not CSE broadcast_in_dim).
    b_hn = jnp.broadcast_to(bhn_ref[...], (b_tile, hdim))
    t_chunk = gi_ref.shape[0]

    def step(t, h_prev):
        gi_t = gi_ref[t]                                            # (B, 3Hp)
        # TODO(synk): per-step MXU weight re-push could be avoided with
        # pltpu.matmul_push_rhs / matmul_acc_lhs holding W_hh^T resident per chunk.
        gh = jnp.dot(h_prev, whh_t,
                     preferred_element_type=jnp.float32)            # (B, 3Hp)
        # Fused sigmoid over the contiguous, lane-aligned r|z slab.
        rz = jax.nn.sigmoid(gi_t[:, :2 * hdim] + gh[:, :2 * hdim])
        r = rz[:, :hdim]
        z = rz[:, hdim:]
        n = jnp.tanh(gi_t[:, 2 * hdim:] + r * (gh[:, 2 * hdim:] + b_hn))
        h_new = (1.0 - z) * n + z * h_prev
        hs_ref[t] = h_new                                           # lane-dense store
        return h_new

    unroll = True if t_chunk <= 8 else 8
    h_last = lax.fori_loop(0, t_chunk, step, h_scr[...], unroll=unroll)
    h_scr[...] = h_last            # carry into the next chunk of this batch tile


@functools.partial(jax.jit, static_argnames=("t_chunk", "b_tile"))
def decoder_rnnt_forward(inputs, params, h0=None, t_chunk=8, b_tile=8):
    """inputs: (B, T) int32 token ids.  Returns (outputs (B,T,O), hidden (1,B,H))."""
    emb, w_ih, w_hh, b_ih, b_hh, w_out, b_out = (
        params["embedding"], params["w_ih"], params["w_hh"],
        params["b_ih"], params["b_hh"], params["w_out"], params["b_out"])

    B, T = inputs.shape
    H = w_hh.shape[1]
    Hp = _round_up(H, _LANE)                     # 128-lane-aligned gate slab width

    # TODO(synk): input_lengths / pack_padded_sequence path not implemented (eval path
    # with full-length sequences only); GRU dropout is a no-op for num_layers=1.

    # --- Batch tiling (padded to 8 sublanes; parallel grid axis for v7x megacore) ---
    b_tile = _round_up(max(b_tile, 1), _SUBLANE)
    B_pad = _round_up(B, _SUBLANE)
    if B_pad < b_tile:
        b_tile = B_pad
    B_pad = _round_up(B_pad, b_tile)
    n_b = B_pad // b_tile

    # --- Gate-padded, pre-transposed weight layout (each gate slab = Hp lanes) ------
    def _gate_pad_T(w, pad_in):
        # w: (3H, H_in) in PyTorch [r; z; n] order -> (pad_in, 3*Hp) transposed,
        # per-gate zero-padded along the output (lane) dim.
        g = w.reshape(3, H, -1)                       # (gate, out, in)
        gT = jnp.transpose(g, (2, 0, 1))              # (in, gate, out)
        gT = jnp.pad(gT, ((0, pad_in - gT.shape[0]), (0, 0), (0, Hp - H)))
        return gT.reshape(pad_in, 3 * Hp)

    w_ih_tp = _gate_pad_T(w_ih, H)                    # (H,  3Hp) acts on the embedding
    w_hh_tp = _gate_pad_T(w_hh, Hp)                   # (Hp, 3Hp) acts on h

    # Fold biases: r/z gates absorb b_ih + b_hh; the n gate absorbs b_ih only
    # (b_hh_n must be applied inside the r*(...) term per PyTorch GRU semantics).
    b_ih3 = b_ih.reshape(3, H)
    b_hh3 = b_hh.reshape(3, H)
    b_gi = jnp.pad(jnp.concatenate([b_ih3[:2] + b_hh3[:2], b_ih3[2:]], axis=0),
                   ((0, 0), (0, Hp - H))).reshape(3 * Hp)            # (3Hp,)
    b_hn = jnp.pad(b_hh3[2], (0, Hp - H)).reshape(1, Hp)             # (1, Hp)

    # --- Hoisted input projection: project the embedding table once, gather rows ----
    # TODO(synk): for large T, keeping gi_table resident in VMEM and gathering inside
    # the kernel (scalar-prefetched token ids) would avoid the (T,B,3Hp) HBM roundtrip;
    # gi could also be stored in bf16 to halve its HBM/VMEM traffic.
    gi_table = jnp.dot(emb, w_ih_tp, preferred_element_type=jnp.float32) + b_gi  # (V, 3Hp)
    gi = jnp.take(gi_table, inputs.T, axis=0)                                     # (T, B, 3Hp)

    # --- Time chunking -----------------------------------------------------------
    t_chunk = max(1, min(t_chunk, T))
    n_chunks = pl.cdiv(T, t_chunk)
    t_pad = n_chunks * t_chunk
    gi = jnp.pad(gi, ((0, t_pad - T), (0, B_pad - B), (0, 0)))

    if h0 is None:
        h0_p = jnp.zeros((1, B_pad, Hp), jnp.float32)
    else:
        h0_p = jnp.pad(h0.astype(jnp.float32),
                       ((0, 0), (0, B_pad - B), (0, Hp - H)))

    # --- Chunked serial recurrence in Pallas ---------------------------------------
    hs = pl.pallas_call(
        _gru_recurrence_kernel,
        out_shape=jax.ShapeDtypeStruct((t_pad, B_pad, Hp), jnp.float32),
        grid_spec=pltpu.PrefetchScalarGridSpec(
            num_scalar_prefetch=0,
            grid=(n_b, n_chunks),                     # (parallel batch, serial time)
            in_specs=[
                pl.BlockSpec((t_chunk, b_tile, 3 * Hp), lambda b, c: (c, b, 0)),  # gi
                pl.BlockSpec((1, b_tile, Hp), lambda b, c: (0, b, 0)),            # h0
                pl.BlockSpec((1, Hp), lambda b, c: (0, 0)),                       # b_hh_n
                pl.BlockSpec(memory_space=pl.ANY),     # W_hh^T (staged manually once)
            ],
            out_specs=pl.BlockSpec((t_chunk, b_tile, Hp), lambda b, c: (c, b, 0)),
            scratch_shapes=[
                pltpu.VMEM((b_tile, Hp), jnp.float32),        # h carry across chunks
                pltpu.VMEM((Hp, 3 * Hp), jnp.float32),        # resident W_hh^T
            ],
        ),
        # TODO(synk): at production shapes on v7x (64 MiB VMEM) set vmem_limit_bytes
        # and re-derive t_chunk / b_tile for the smaller budget.
        compiler_params=pltpu.CompilerParams(
            dimension_semantics=("parallel", "arbitrary")),
    )(gi, h0_p, b_hn, w_hh_tp)

    # --- Hoisted out_proj: one lane-dense batched matmul, batch-first directly ------
    hs_v = hs[:T, :B, :H]                                                    # (T, B, H)
    outputs = jnp.einsum("tbh,oh->bto", hs_v, w_out) + b_out                 # (B, T, O)
    hidden_states = hs_v[T - 1][None]                                        # (1, B, H)
    return outputs, hidden_states


def init_params(key, num_classes, hidden_state_dim, output_dim):
    """Deterministic synthetic parameters matching nn.Embedding / nn.GRU / nn.Linear shapes."""
    H, O = hidden_state_dim, output_dim
    ks = jax.random.split(key, 7)
    scale = 1.0 / jnp.sqrt(H)
    return {
        "embedding": jax.random.normal(ks[0], (num_classes, H), jnp.float32) * 0.1,
        "w_ih": jax.random.uniform(ks[1], (3 * H, H), jnp.float32, -scale, scale),
        "w_hh": jax.random.uniform(ks[2], (3 * H, H), jnp.float32, -scale, scale),
        "b_ih": jax.random.uniform(ks[3], (3 * H,), jnp.float32, -scale, scale),
        "b_hh": jax.random.uniform(ks[4], (3 * H,), jnp.float32, -scale, scale),
        "w_out": jax.random.uniform(ks[5], (O, H), jnp.float32, -scale, scale),
        "b_out": jax.random.uniform(ks[6], (O,), jnp.float32, -scale, scale),
    }


def _reference_forward(inputs, params, h0=None):
    """Pure-JAX reference (PyTorch GRU semantics) for correctness check."""
    emb, w_ih, w_hh, b_ih, b_hh, w_out, b_out = (
        params["embedding"], params["w_ih"], params["w_hh"],
        params["b_ih"], params["b_hh"], params["w_out"], params["b_out"])
    B, T = inputs.shape
    H = w_hh.shape[1]
    x = jnp.take(emb, inputs, axis=0)                    # (B, T, H)
    h = jnp.zeros((B, H), jnp.float32) if h0 is None else h0[0]

    def step(h_prev, x_t):
        gi = x_t @ w_ih.T + b_ih
        gh = h_prev @ w_hh.T + b_hh
        i_r, i_z, i_n = jnp.split(gi, 3, axis=-1)
        h_r, h_z, h_n = jnp.split(gh, 3, axis=-1)
        r = jax.nn.sigmoid(i_r + h_r)
        z = jax.nn.sigmoid(i_z + h_z)
        n = jnp.tanh(i_n + r * h_n)
        h_new = (1.0 - z) * n + z * h_prev
        return h_new, h_new

    h_last, hs = lax.scan(step, h, jnp.transpose(x, (1, 0, 2)))
    outs = jnp.einsum("tbh,oh->tbo", hs, w_out) + b_out
    return jnp.transpose(outs, (1, 0, 2)), h_last[None]


if __name__ == "__main__":
    num_classes = 40
    hidden_state_dim = 32
    output_dim = 48
    batch, seq_len = 2, 8

    key = jax.random.PRNGKey(0)
    pkey, tkey = jax.random.split(key)
    params = init_params(pkey, num_classes, hidden_state_dim, output_dim)

    # Deterministic target token ids (batch, seq_length), as in forward(inputs).
    inputs = jax.random.randint(tkey, (batch, seq_len), 0, num_classes, dtype=jnp.int32)

    # t_chunk=4 -> grid=(1, 2): exercises the cross-chunk hidden-state carry and lets
    # the gi DMA of chunk 1 overlap the serial compute of chunk 0.
    outputs, hidden_states = decoder_rnnt_forward(inputs, params, t_chunk=4)
    outputs = jax.block_until_ready(outputs)
    hidden_states = jax.block_until_ready(hidden_states)

    # Sanity check against the pure-JAX reference.
    ref_out, ref_h = _reference_forward(inputs, params)
    assert outputs.shape == (batch, seq_len, output_dim)
    assert hidden_states.shape == (1, batch, hidden_state_dim)
    assert jnp.allclose(outputs, ref_out, atol=1e-5, rtol=1e-5)
    assert jnp.allclose(hidden_states, ref_h, atol=1e-5, rtol=1e-5)

    print("KERNEL_OK")
</pallas_src>

<mosaic_0001>
module attributes {stable_mosaic.version = 11 : i64} {
  func.func @_gru_recurrence_kernel(%arg0: i32, %arg1: i32, %arg2: memref<4x8x384xf32, #tpu.memory_space<vmem>>, %arg3: memref<1x8x128xf32, #tpu.memory_space<vmem>>, %arg4: memref<1x128xf32, #tpu.memory_space<vmem>>, %arg5: memref<128x384xf32, #tpu.memory_space<any>>, %arg6: memref<4x8x128xf32, #tpu.memory_space<vmem>>, %arg7: memref<8x128xf32, #tpu.memory_space<vmem>>, %arg8: memref<128x384xf32, #tpu.memory_space<vmem>>) attributes {dimension_semantics = [#tpu.dimension_semantics<parallel>, #tpu.dimension_semantics<arbitrary>], iteration_bounds = array<i64: 1, 2>, scalar_prefetch = 0 : i64, scratch_operands = 2 : i64, tpu.core_type = #tpu.core_type<tc>, window_params = [{transform_indices = @transform_0, window_bounds = array<i64: 4, 8, 384>}, {transform_indices = @transform_1, window_bounds = array<i64: 1, 8, 128>}, {pipeline_mode = #tpu.pipeline_mode<synchronous>, transform_indices = @transform_2, window_bounds = array<i64: 1, 128>}, {}, {transform_indices = @transform_4, window_bounds = array<i64: 4, 8, 128>}]} {
    %c0_i32 = arith.constant 0 : i32
    %0 = arith.cmpi eq, %arg1, %c0_i32 : i32
    %1 = arith.extui %0 : i1 to i32
    %c0_i32_0 = arith.constant 0 : i32
    %2 = arith.cmpi ne, %1, %c0_i32_0 : i32
    scf.if %2 {
      "tpu.region"() ({
        %128 = tpu.sem_alloc : memref<!tpu.dma_semaphore, #tpu.memory_space<semaphore_mem>>
        tpu.enqueue_dma source(%arg5 : memref<128x384xf32, #tpu.memory_space<any>>) target(%arg8 : memref<128x384xf32, #tpu.memory_space<vmem>>) target_semaphore(%128 : memref<!tpu.dma_semaphore, #tpu.memory_space<semaphore_mem>>)
        tpu.wait_dma2 semaphore(%128 : memref<!tpu.dma_semaphore, #tpu.memory_space<semaphore_mem>>) src(%arg5 : memref<128x384xf32, #tpu.memory_space<any>>) dst(%arg8 : memref<128x384xf32, #tpu.memory_space<vmem>>)
        tpu.yield
      }) : () -> ()
      %c0_36 = arith.constant 0 : index
      %c0_37 = arith.constant 0 : index
      %c0_38 = arith.constant 0 : index
      %125 = vector.load %arg3[%c0_36, %c0_37, %c0_38] : memref<1x8x128xf32, #tpu.memory_space<vmem>>, vector<1x8x128xf32>
      %126 = vector.shape_cast %125 : vector<1x8x128xf32> to vector<8x128xf32>
      %c0_39 = arith.constant 0 : index
      %c0_40 = arith.constant 0 : index
      %127 = vector.load %arg7[%c0_39, %c0_40] : memref<8x128xf32, #tpu.memory_space<vmem>>, vector<8x128xf32>
      tpu.vector_store %arg7[%c0_39, %c0_40], %126 {strides = array<i32>} : memref<8x128xf32, #tpu.memory_space<vmem>>, vector<8x128xf32>,
    } else {
    }
    %c0 = arith.constant 0 : index
    %c0_1 = arith.constant 0 : index
    %3 = vector.load %arg8[%c0, %c0_1] : memref<128x384xf32, #tpu.memory_space<vmem>>, vector<128x384xf32>
    %c0_2 = arith.constant 0 : index
    %c0_3 = arith.constant 0 : index
    %4 = vector.load %arg4[%c0_2, %c0_3] : memref<1x128xf32, #tpu.memory_space<vmem>>, vector<1x128xf32>
    %5 = vector.shape_cast %4 : vector<1x128xf32> to vector<1x128xf32>
    %6 = vector.broadcast %5 : vector<1x128xf32> to vector<8x128xf32>
    %c0_4 = arith.constant 0 : index
    %c0_5 = arith.constant 0 : index
    %7 = vector.load %arg7[%c0_4, %c0_5] : memref<8x128xf32, #tpu.memory_space<vmem>>, vector<8x128xf32>
    %c0_i32_6 = arith.constant 0 : i32
    %8 = arith.index_cast %c0_i32_6 : i32 to index
    %c0_7 = arith.constant 0 : index
    %c0_8 = arith.constant 0 : index
    %9 = vector.load %arg2[%8, %c0_7, %c0_8] : memref<4x8x384xf32, #tpu.memory_space<vmem>>, vector<1x8x384xf32>
    %10 = vector.shape_cast %9 : vector<1x8x384xf32> to vector<8x384xf32>
    %cst = arith.constant dense<0.000000e+00> : vector<8x384xf32>
    %11 = tpu.matmul %7, %3, %cst {dimension_numbers = #tpu.dot_dimension_numbers<[1], [0], [0], [1], [0, 0, 1, 1], [], []>} : vector<8x128xf32>, vector<128x384xf32>, vector<8x384xf32> -> vector<8x384xf32>
    %12 = vector.extract_strided_slice %10 {offsets = [0, 0], sizes = [8, 256], strides = [1, 1]} : vector<8x384xf32> to vector<8x256xf32>
    %13 = vector.extract_strided_slice %11 {offsets = [0, 0], sizes = [8, 256], strides = [1, 1]} : vector<8x384xf32> to vector<8x256xf32>
    %14 = arith.addf %12, %13 : vector<8x256xf32>
    %15 = arith.negf %14 : vector<8x256xf32>
    %16 = math.exp %15 : vector<8x256xf32>
    %cst_9 = arith.constant 1.000000e+00 : f32
    %17 = vector.broadcast %cst_9 : f32 to vector<8x256xf32>
    %18 = arith.addf %17, %16 : vector<8x256xf32>
    %19 = arith.divf %17, %18 : vector<8x256xf32>
    %20 = vector.extract_strided_slice %19 {offsets = [0, 0], sizes = [8, 128], strides = [1, 1]} : vector<8x256xf32> to vector<8x128xf32>
    %21 = vector.extract_strided_slice %19 {offsets = [0, 128], sizes = [8, 128], strides = [1, 1]} : vector<8x256xf32> to vector<8x128xf32>
    %22 = vector.extract_strided_slice %10 {offsets = [0, 256], sizes = [8, 128], strides = [1, 1]} : vector<8x384xf32> to vector<8x128xf32>
    %23 = vector.extract_strided_slice %11 {offsets = [0, 256], sizes = [8, 128], strides = [1, 1]} : vector<8x384xf32> to vector<8x128xf32>
    %24 = arith.addf %23, %6 : vector<8x128xf32>
    %25 = arith.mulf %20, %24 : vector<8x128xf32>
    %26 = arith.addf %22, %25 : vector<8x128xf32>
    %27 = math.tanh %26 : vector<8x128xf32>
    %cst_10 = arith.constant 1.000000e+00 : f32
    %28 = vector.broadcast %cst_10 : f32 to vector<8x128xf32>
    %29 = arith.subf %28, %21 : vector<8x128xf32>
    %30 = arith.mulf %29, %27 : vector<8x128xf32>
    %31 = arith.mulf %21, %7 : vector<8x128xf32>
    %32 = arith.addf %30, %31 : vector<8x128xf32>
    %33 = arith.index_cast %c0_i32_6 : i32 to index
    %c0_11 = arith.constant 0 : index
    %c0_12 = arith.constant 0 : index
    %34 = vector.load %arg6[%33, %c0_11, %c0_12] : memref<4x8x128xf32, #tpu.memory_space<vmem>>, vector<1x8x128xf32>
    %35 = vector.shape_cast %34 : vector<1x8x128xf32> to vector<8x128xf32>
    %36 = vector.shape_cast %32 : vector<8x128xf32> to vector<1x8x128xf32>
    tpu.vector_store %arg6[%33, %c0_11, %c0_12], %36 {strides = array<i32>} : memref<4x8x128xf32, #tpu.memory_space<vmem>>, vector<1x8x128xf32>,
    %c1_i32 = arith.constant 1 : i32
    %37 = arith.index_cast %c1_i32 : i32 to index
    %c0_13 = arith.constant 0 : index
    %c0_14 = arith.constant 0 : index
    %38 = vector.load %arg2[%37, %c0_13, %c0_14] : memref<4x8x384xf32, #tpu.memory_space<vmem>>, vector<1x8x384xf32>
    %39 = vector.shape_cast %38 : vector<1x8x384xf32> to vector<8x384xf32>
    %cst_15 = arith.constant dense<0.000000e+00> : vector<8x384xf32>
    %40 = tpu.matmul %32, %3, %cst_15 {dimension_numbers = #tpu.dot_dimension_numbers<[1], [0], [0], [1], [0, 0, 1, 1], [], []>} : vector<8x128xf32>, vector<128x384xf32>, vector<8x384xf32> -> vector<8x384xf32>
    %41 = vector.extract_strided_slice %39 {offsets = [0, 0], sizes = [8, 256], strides = [1, 1]} : vector<8x384xf32> to vector<8x256xf32>
    %42 = vector.extract_strided_slice %40 {offsets = [0, 0], sizes = [8, 256], strides = [1, 1]} : vector<8x384xf32> to vector<8x256xf32>
    %43 = arith.addf %41, %42 : vector<8x256xf32>
    %44 = arith.negf %43 : vector<8x256xf32>
    %45 = math.exp %44 : vector<8x256xf32>
    %cst_16 = arith.constant 1.000000e+00 : f32
    %46 = vector.broadcast %cst_16 : f32 to vector<8x256xf32>
    %47 = arith.addf %46, %45 : vector<8x256xf32>
    %48 = arith.divf %46, %47 : vector<8x256xf32>
    %49 = vector.extract_strided_slice %48 {offsets = [0, 0], sizes = [8, 128], strides = [1, 1]} : vector<8x256xf32> to vector<8x128xf32>
    %50 = vector.extract_strided_slice %48 {offsets = [0, 128], sizes = [8, 128], strides = [1, 1]} : vector<8x256xf32> to vector<8x128xf32>
    %51 = vector.extract_strided_slice %39 {offsets = [0, 256], sizes = [8, 128], strides = [1, 1]} : vector<8x384xf32> to vector<8x128xf32>
    %52 = vector.extract_strided_slice %40 {offsets = [0, 256], sizes = [8, 128], strides = [1, 1]} : vector<8x384xf32> to vector<8x128xf32>
    %53 = arith.addf %52, %6 : vector<8x128xf32>
    %54 = arith.mulf %49, %53 : vector<8x128xf32>
    %55 = arith.addf %51, %54 : vector<8x128xf32>
    %56 = math.tanh %55 : vector<8x128xf32>
    %cst_17 = arith.constant 1.000000e+00 : f32
    %57 = vector.broadcast %cst_17 : f32 to vector<8x128xf32>
    %58 = arith.subf %57, %50 : vector<8x128xf32>
    %59 = arith.mulf %58, %56 : vector<8x128xf32>
    %60 = arith.mulf %50, %32 : vector<8x128xf32>
    %61 = arith.addf %59, %60 : vector<8x128xf32>
    %62 = arith.index_cast %c1_i32 : i32 to index
    %c0_18 = arith.constant 0 : index
    %c0_19 = arith.constant 0 : index
    %63 = vector.load %arg6[%62, %c0_18, %c0_19] : memref<4x8x128xf32, #tpu.memory_space<vmem>>, vector<1x8x128xf32>
    %64 = vector.shape_cast %63 : vector<1x8x128xf32> to vector<8x128xf32>
    %65 = vector.shape_cast %61 : vector<8x128xf32> to vector<1x8x128xf32>
    tpu.vector_store %arg6[%62, %c0_18, %c0_19], %65 {strides = array<i32>} : memref<4x8x128xf32, #tpu.memory_space<vmem>>, vector<1x8x128xf32>,
    %c2_i32 = arith.constant 2 : i32
    %66 = arith.index_cast %c2_i32 : i32 to index
    %c0_20 = arith.constant 0 : index
    %c0_21 = arith.constant 0 : index
    %67 = vector.load %arg2[%66, %c0_20, %c0_21] : memref<4x8x384xf32, #tpu.memory_space<vmem>>, vector<1x8x384xf32>
    %68 = vector.shape_cast %67 : vector<1x8x384xf32> to vector<8x384xf32>
    %cst_22 = arith.constant dense<0.000000e+00> : vector<8x384xf32>
    %69 = tpu.matmul %61, %3, %cst_22 {dimension_numbers = #tpu.dot_dimension_numbers<[1], [0], [0], [1], [0, 0, 1, 1], [], []>} : vector<8x128xf32>, vector<128x384xf32>, vector<8x384xf32> -> vector<8x384xf32>
    %70 = vector.extract_strided_slice %68 {offsets = [0, 0], sizes = [8, 256], strides = [1, 1]} : vector<8x384xf32> to vector<8x256xf32>
    %71 = vector.extract_strided_slice %69 {offsets = [0, 0], sizes = [8, 256], strides = [1, 1]} : vector<8x384xf32> to vector<8x256xf32>
    %72 = arith.addf %70, %71 : vector<8x256xf32>
    %73 = arith.negf %72 : vector<8x256xf32>
    %74 = math.exp %73 : vector<8x256xf32>
    %cst_23 = arith.constant 1.000000e+00 : f32
    %75 = vector.broadcast %cst_23 : f32 to vector<8x256xf32>
    %76 = arith.addf %75, %74 : vector<8x256xf32>
    %77 = arith.divf %75, %76 : vector<8x256xf32>
    %78 = vector.extract_strided_slice %77 {offsets = [0, 0], sizes = [8, 128], strides = [1, 1]} : vector<8x256xf32> to vector<8x128xf32>
    %79 = vector.extract_strided_slice %77 {offsets = [0, 128], sizes = [8, 128], strides = [1, 1]} : vector<8x256xf32> to vector<8x128xf32>
    %80 = vector.extract_strided_slice %68 {offsets = [0, 256], sizes = [8, 128], strides = [1, 1]} : vector<8x384xf32> to vector<8x128xf32>
    %81 = vector.extract_strided_slice %69 {offsets = [0, 256], sizes = [8, 128], strides = [1, 1]} : vector<8x384xf32> to vector<8x128xf32>
    %82 = arith.addf %81, %6 : vector<8x128xf32>
    %83 = arith.mulf %78, %82 : vector<8x128xf32>
    %84 = arith.addf %80, %83 : vector<8x128xf32>
    %85 = math.tanh %84 : vector<8x128xf32>
    %cst_24 = arith.constant 1.000000e+00 : f32
    %86 = vector.broadcast %cst_24 : f32 to vector<8x128xf32>
    %87 = arith.subf %86, %79 : vector<8x128xf32>
    %88 = arith.mulf %87, %85 : vector<8x128xf32>
    %89 = arith.mulf %79, %61 : vector<8x128xf32>
    %90 = arith.addf %88, %89 : vector<8x128xf32>
    %91 = arith.index_cast %c2_i32 : i32 to index
    %c0_25 = arith.constant 0 : index
    %c0_26 = arith.constant 0 : index
    %92 = vector.load %arg6[%91, %c0_25, %c0_26] : memref<4x8x128xf32, #tpu.memory_space<vmem>>, vector<1x8x128xf32>
    %93 = vector.shape_cast %92 : vector<1x8x128xf32> to vector<8x128xf32>
    %94 = vector.shape_cast %90 : vector<8x128xf32> to vector<1x8x128xf32>
    tpu.vector_store %arg6[%91, %c0_25, %c0_26], %94 {strides = array<i32>} : memref<4x8x128xf32, #tpu.memory_space<vmem>>, vector<1x8x128xf32>,
    %c3_i32 = arith.constant 3 : i32
    %95 = arith.index_cast %c3_i32 : i32 to index
    %c0_27 = arith.constant 0 : index
    %c0_28 = arith.constant 0 : index
    %96 = vector.load %arg2[%95, %c0_27, %c0_28] : memref<4x8x384xf32, #tpu.memory_space<vmem>>, vector<1x8x384xf32>
    %97 = vector.shape_cast %96 : vector<1x8x384xf32> to vector<8x384xf32>
    %cst_29 = arith.constant dense<0.000000e+00> : vector<8x384xf32>
    %98 = tpu.matmul %90, %3, %cst_29 {dimension_numbers = #tpu.dot_dimension_numbers<[1], [0], [0], [1], [0, 0, 1, 1], [], []>} : vector<8x128xf32>, vector<128x384xf32>, vector<8x384xf32> -> vector<8x384xf32>
    %99 = vector.extract_strided_slice %97 {offsets = [0, 0], sizes = [8, 256], strides = [1, 1]} : vector<8x384xf32> to vector<8x256xf32>
    %100 = vector.extract_strided_slice %98 {offsets = [0, 0], sizes = [8, 256], strides = [1, 1]} : vector<8x384xf32> to vector<8x256xf32>
    %101 = arith.addf %99, %100 : vector<8x256xf32>
    %102 = arith.negf %101 : vector<8x256xf32>
    %103 = math.exp %102 : vector<8x256xf32>
    %cst_30 = arith.constant 1.000000e+00 : f32
    %104 = vector.broadcast %cst_30 : f32 to vector<8x256xf32>
    %105 = arith.addf %104, %103 : vector<8x256xf32>
    %106 = arith.divf %104, %105 : vector<8x256xf32>
    %107 = vector.extract_strided_slice %106 {offsets = [0, 0], sizes = [8, 128], strides = [1, 1]} : vector<8x256xf32> to vector<8x128xf32>
    %108 = vector.extract_strided_slice %106 {offsets = [0, 128], sizes = [8, 128], strides = [1, 1]} : vector<8x256xf32> to vector<8x128xf32>
    %109 = vector.extract_strided_slice %97 {offsets = [0, 256], sizes = [8, 128], strides = [1, 1]} : vector<8x384xf32> to vector<8x128xf32>
    %110 = vector.extract_strided_slice %98 {offsets = [0, 256], sizes = [8, 128], strides = [1, 1]} : vector<8x384xf32> to vector<8x128xf32>
    %111 = arith.addf %110, %6 : vector<8x128xf32>
    %112 = arith.mulf %107, %111 : vector<8x128xf32>
    %113 = arith.addf %109, %112 : vector<8x128xf32>
    %114 = math.tanh %113 : vector<8x128xf32>
    %cst_31 = arith.constant 1.000000e+00 : f32
    %115 = vector.broadcast %cst_31 : f32 to vector<8x128xf32>
    %116 = arith.subf %115, %108 : vector<8x128xf32>
    %117 = arith.mulf %116, %114 : vector<8x128xf32>
    %118 = arith.mulf %108, %90 : vector<8x128xf32>
    %119 = arith.addf %117, %118 : vector<8x128xf32>
    %120 = arith.index_cast %c3_i32 : i32 to index
    %c0_32 = arith.constant 0 : index
    %c0_33 = arith.constant 0 : index
    %121 = vector.load %arg6[%120, %c0_32, %c0_33] : memref<4x8x128xf32, #tpu.memory_space<vmem>>, vector<1x8x128xf32>
    %122 = vector.shape_cast %121 : vector<1x8x128xf32> to vector<8x128xf32>
    %123 = vector.shape_cast %119 : vector<8x128xf32> to vector<1x8x128xf32>
    tpu.vector_store %arg6[%120, %c0_32, %c0_33], %123 {strides = array<i32>} : memref<4x8x128xf32, #tpu.memory_space<vmem>>, vector<1x8x128xf32>,
    %c4_i32 = arith.constant 4 : i32
    %c0_34 = arith.constant 0 : index
    %c0_35 = arith.constant 0 : index
    %124 = vector.load %arg7[%c0_34, %c0_35] : memref<8x128xf32, #tpu.memory_space<vmem>>, vector<8x128xf32>
    tpu.vector_store %arg7[%c0_34, %c0_35], %119 {strides = array<i32>} : memref<8x128xf32, #tpu.memory_space<vmem>>, vector<8x128xf32>,
    return
  }
  func.func @transform_0(%arg0: i32, %arg1: i32) -> (i32, i32, i32) {
    %c0_i32 = arith.constant 0 : i32
    %c0_i32_0 = arith.constant 0 : i32
    return %arg1, %arg0, %c0_i32 : i32, i32, i32
  }
  func.func @transform_1(%arg0: i32, %arg1: i32) -> (i32, i32, i32) {
    %c0_i32 = arith.constant 0 : i32
    %c0_i32_0 = arith.constant 0 : i32
    %c0_i32_1 = arith.constant 0 : i32
    return %c0_i32, %arg0, %c0_i32_0 : i32, i32, i32
  }
  func.func @transform_2(%arg0: i32, %arg1: i32) -> (i32, i32) {
    %c0_i32 = arith.constant 0 : i32
    %c0_i32_0 = arith.constant 0 : i32
    %c0_i32_1 = arith.constant 0 : i32
    return %c0_i32, %c0_i32_0 : i32, i32
  }
  func.func @transform_4(%arg0: i32, %arg1: i32) -> (i32, i32, i32) {
    %c0_i32 = arith.constant 0 : i32
    %c0_i32_0 = arith.constant 0 : i32
    return %arg1, %arg0, %c0_i32 : i32, i32, i32
  }
}

</mosaic_0001>

<llo_original>
// kernel: decoder_rnnt_forward.1
$region0: #{decoder_rnnt_forward.1}
  #allocation0 [shape = 'u32[]', space=smem, size = 0x4, offset = 0x4, fixed_abs, tag = 'smem constant byte address 0x4 - core index']
  #allocation1 [shape = 'u32[144,128]{1,0:T(1,128)}', space=vmem, size = 0x12000, scoped, tag = 'internal scratch']
  #allocation2 [shape = 'f32[8,128]{1,0:T(8,128)}', space=vmem, size = 0x1000, scoped, tag = 'scratch operand']
  #allocation3 [shape = 'f32[128,384]{1,0:T(8,128)}', space=vmem, size = 0x30000, scoped, tag = 'scratch operand']
  #allocation5 [shape = 's32[]', space=sflag, size = 0x4, offset = 0, fixed_abs, tag = 'sflag constant byte address 0x0 - dummy sync flag']
  %s0 = inlined_call_operand.vmem [shape: f32[8,8,384], index: 0, kind: input, shape index: {}]
  %s1 = inlined_call_operand.vmem [shape: f32[1,8,128], index: 1, kind: input, shape index: {}]
  %s2 = inlined_call_operand.vmem [shape: f32[1,128], index: 2, kind: input, shape index: {}]
  %s3 = inlined_call_operand.vmem [shape: f32[128,384], index: 3, kind: input, shape index: {}]
  %s4 = inlined_call_operand.vmem [shape: f32[8,8,128], index: 4, kind: output, shape index: {}]
  %s5 = sld [smem:[#allocation0]]
  $region84: #{decoder_rnnt_forward.1} parent=0
    _
  %s7 = ssub.s32 1, %s5
  %s8 = scalar_select 0, %s7, %s5
  loop: start=0, step=1, limit=4
  $region2: #{decoder_rnnt_forward.1} parent=0 // loop_pre_header
    _
  $region3: #{decoder_rnnt_forward.1} parent=0 // loop_header
    %s10 = sphi 0, %s14
    %p11 = scmp.ge.s32.totalorder %s10, 4
    %s17 = sphi 0, %s29
    %s18 = sphi 0, %s25
    %s19 = sphi 0, %s17
    %s20 = sphi 0, %s18
    %s21 = sphi 0, %s19
    %s22 = sphi 0, %s20
    %s34 = sphi 0, %s36
    %s37 = sphi 0, %s34
    %s38 = sphi 0, %s37
    %s54 = sphi 0, %s38
    %s60 = sphi 0, %s62
    %s63 = sphi 0, %s60
    %s64 = sphi 0, %s63
    %s80 = sphi 0, %s64
    %s84 = sphi 0, %s84
    %s86 = sphi 0, %s84
    %s87 = sphi 0, %s86
    %s101 = sphi 0, %s87
    %s109 = sphi 0, %s111
    %s112 = sphi 0, %s109
    %s113 = sphi 0, %s112
    %s129 = sphi 0, %s113
  $region4: #{decoder_rnnt_forward.1} parent=0 // loop_header_branch
    %13 = sbr.rel (%p11) target = $region8
  $region5: #{decoder_rnnt_forward.1} parent=0 // loop_body
    %s15 = ssub.s32 %s10, 1
    %s16 = ssub.s32 %s10, 2
    %s23 = sadd.s32 1, %s18
    %p24 = scmp.ge.s32.totalorder %s23, 2
    %s25 = scalar_select %p24, 0, %s23
    %s26 = sadd.s32 1, %s17
    %s27 = scalar_select %p24, %s26, %s17
    %p28 = scmp.ge.s32.totalorder %s27, 1
    %s29 = scalar_select %p28, 0, %s27
    %s30 = ssub.s32 %s18, %s25
    %s31 = ssub.s32 %s17, %s29
    %s32 = sor.u32 %s30, %s31
    %p33 = scmp.eq.s32.totalorder %s32, 0
    %s35 = sadd.s32 %s34, 1
    %s36 = scalar_select %p33, %s34, %s35
    %p39 = pneg %p33
    %p40 = scmp.eq.s32.totalorder %s10, 1
    %p41 = por %p39, %p40
    %p42 = scmp.ne.s32.totalorder %s34, %s37
    %p43 = scmp.eq.s32.totalorder %s10, 0
    %p44 = por %p42, %p43
    %p45 = scmp.ne.s32.totalorder %s34, %s37
    %p46 = scmp.eq.s32.totalorder %s15, 1
    %p47 = por %p45, %p46
    %p48 = scmp.ne.s32.totalorder %s37, %s38
    %p49 = scmp.eq.s32.totalorder %s15, 0
    %p50 = por %p48, %p49
    %p51 = scmp.ne.s32.totalorder %s37, %s38
    %p52 = scmp.eq.s32.totalorder %s16, 1
    %p53 = por %p51, %p52
    %p55 = scmp.ne.s32.totalorder %s38, %s54
    %p56 = scmp.eq.s32.totalorder %s16, 0
    %p57 = por %p55, %p56
    %s58 = ssub.s32 %s17, %s29
    %p59 = scmp.eq.s32.totalorder %s58, 0
    %s61 = sadd.s32 %s60, 1
    %s62 = scalar_select %p59, %s60, %s61
    %p65 = pneg %p59
    %p66 = scmp.eq.s32.totalorder %s10, 1
    %p67 = por %p65, %p66
    %p68 = scmp.ne.s32.totalorder %s60, %s63
    %p69 = scmp.eq.s32.totalorder %s10, 0
    %p70 = por %p68, %p69
    %p71 = scmp.ne.s32.totalorder %s60, %s63
    %p72 = scmp.eq.s32.totalorder %s15, 1
    %p73 = por %p71, %p72
    %p74 = scmp.ne.s32.totalorder %s63, %s64
    %p75 = scmp.eq.s32.totalorder %s15, 0
    %p76 = por %p74, %p75
    %p77 = scmp.ne.s32.totalorder %s63, %s64
    %p78 = scmp.eq.s32.totalorder %s16, 1
    %p79 = por %p77, %p78
    %p81 = scmp.ne.s32.totalorder %s64, %s80
    %p82 = scmp.eq.s32.totalorder %s16, 0
    %p83 = por %p81, %p82
    %s85 = sadd.s32 %s84, 1
    %p88 = scmp.eq.s32.totalorder %s10, 1
    %p89 = scmp.ne.s32.totalorder %s84, %s86
    %p90 = scmp.eq.s32.totalorder %s10, 0
    %p91 = por %p89, %p90
    %p92 = scmp.ne.s32.totalorder %s84, %s86
    %p93 = scmp.eq.s32.totalorder %s15, 1
    %p94 = por %p92, %p93
    %p95 = scmp.ne.s32.totalorder %s86, %s87
    %p96 = scmp.eq.s32.totalorder %s15, 0
    %p97 = por %p95, %p96
    %p98 = scmp.ne.s32.totalorder %s86, %s87
    %p99 = scmp.eq.s32.totalorder %s16, 1
    %p100 = por %p98, %p99
    %p102 = scmp.ne.s32.totalorder %s87, %s101
    %p103 = scmp.eq.s32.totalorder %s16, 0
    %p104 = por %p102, %p103
    %s105 = ssub.s32 %s18, %s25
    %s106 = ssub.s32 %s17, %s29
    %s107 = sor.u32 %s105, %s106
    %p108 = scmp.eq.s32.totalorder %s107, 0
    %s110 = sadd.s32 %s109, 1
    %s111 = scalar_select %p108, %s109, %s110
    %p114 = pneg %p108
    %p115 = scmp.eq.s32.totalorder %s10, 1
    %p116 = por %p114, %p115
    %p117 = scmp.ne.s32.totalorder %s109, %s112
    %p118 = scmp.eq.s32.totalorder %s10, 0
    %p119 = por %p117, %p118
    %p120 = scmp.ne.s32.totalorder %s109, %s112
    %p121 = scmp.eq.s32.totalorder %s15, 1
    %p122 = por %p120, %p121
    %p123 = scmp.ne.s32.totalorder %s112, %s113
    %p124 = scmp.eq.s32.totalorder %s15, 0
    %p125 = por %p123, %p124
    %p126 = scmp.ne.s32.totalorder %s112, %s113
    %p127 = scmp.eq.s32.totalorder %s16, 1
    %p128 = por %p126, %p127
    %p130 = scmp.ne.s32.totalorder %s113, %s129
    %p131 = scmp.eq.s32.totalorder %s16, 0
    %p132 = por %p130, %p131
    %p133 = scmp.le.s32.totalorder 1, %s10
    %p134 = scmp.lt.s32.totalorder %s10, 3
    %p135 = pnand %p133, %p134
    %p136 = pneg %p135
    // Predicated region
    $region9: #{decoder_rnnt_forward.1} parent=5 // pred_check
      _
    $region10: #{decoder_rnnt_forward.1} parent=5 // pred_check_branch
      %138 = sbr.rel (%p135) target = $region12
    $region11: #{decoder_rnnt_forward.1} parent=5 // pred_region
      %s139 = ssub.s32 %s10, 1
      // Predicated region
      $region13: #{decoder_rnnt_forward.1} parent=11 // pred_check
        %p140 = pneg %p76
      $region14: #{decoder_rnnt_forward.1} parent=11 // pred_check_branch
        %142 = sbr.rel (%p140) target = $region16
      $region15: #{decoder_rnnt_forward.1} parent=11 // pred_region
        %p143 = scmp.lt.s32.totalorder %s19, 0
        %s144 = scalar_select %p143, %s19, 0
        %s145 = smul.addr %s144, 8
        %s146 = scalar_lea.vmem %s1, %s145
      $region16: #{decoder_rnnt_forward.1} parent=11 // pred_fallthru
        _
      // Predicated region
      $region17: #{decoder_rnnt_forward.1} parent=11 // pred_check
        %p147 = pneg %p97
      $region18: #{decoder_rnnt_forward.1} parent=11 // pred_check_branch
        %149 = sbr.rel (%p147) target = $region20
      $region19: #{decoder_rnnt_forward.1} parent=11 // pred_region
        _
      $region20: #{decoder_rnnt_forward.1} parent=11 // pred_fallthru
        _
    $region12: #{decoder_rnnt_forward.1} parent=5 // pred_fallthru
      _
    %p150 = scmp.lt.s32.totalorder %s10, 2
    // Predicated region
    $region21: #{decoder_rnnt_forward.1} parent=5 // pred_check
      %p151 = pneg %p150
    $region22: #{decoder_rnnt_forward.1} parent=5 // pred_check_branch
      %153 = sbr.rel (%p151) target = $region24
    $region23: #{decoder_rnnt_forward.1} parent=5 // pred_region
      // Predicated region
      $region25: #{decoder_rnnt_forward.1} parent=23 // pred_check
        %p154 = pneg %p44
      $region26: #{decoder_rnnt_forward.1} parent=23 // pred_check_branch
        %156 = sbr.rel (%p154) target = $region28
      $region27: #{decoder_rnnt_forward.1} parent=23 // pred_region
        %s157 = smul.u32 4, %s18
        %p158 = scmp.lt.s32.totalorder %s157, 7
        %s159 = scalar_select %p158, %s157, 7
        %p160 = scmp.lt.s32.totalorder %s17, 0
        %s161 = scalar_select %p160, %s17, 0
        %s162 = smul.addr %s161, 3
        %s163 = smul.addr %s159, 3
        %s164 = sadd.s32 %s162, %s163
        %s165 = smul.addr %s164, 8
        %s166 = scalar_lea.vmem %s0, %s165
        %s167 = smul.u32 4, %s18
      $region28: #{decoder_rnnt_forward.1} parent=23 // pred_fallthru
        _
    $region24: #{decoder_rnnt_forward.1} parent=5 // pred_fallthru
      _
    %p168 = scmp.le.s32.totalorder 1, %s10
    %p169 = scmp.lt.s32.totalorder %s10, 3
    %p170 = pnand %p168, %p169
    %p171 = pneg %p170
    // Predicated region
    $region29: #{decoder_rnnt_forward.1} parent=5 // pred_check
      _
    $region30: #{decoder_rnnt_forward.1} parent=5 // pred_check_branch
      %173 = sbr.rel (%p170) target = $region32
    $region31: #{decoder_rnnt_forward.1} parent=5 // pred_region
      %s174 = ssub.s32 %s10, 1
      %s175 = smul.u32 4, %s20
      %p176 = scmp.lt.s32.totalorder %s175, 7
      %s177 = scalar_select %p176, %s175, 7
      %p178 = scmp.lt.s32.totalorder %s19, 0
      %s179 = scalar_select %p178, %s19, 0
      %s180 = smul.addr %s179, 3
      %s181 = smul.addr %s177, 3
      %s182 = sadd.s32 %s180, %s181
      %s183 = smul.addr %s182, 8
      %s184 = scalar_lea.vmem %s0, %s183
      %p185 = pneg %p50
      %p186 = pneg %p47
      %p187 = scmp.lt.s32.totalorder %s19, 0
      %s188 = scalar_select %p187, %s19, 0
      %s189 = smul.addr %s188, 8
      %s190 = scalar_lea.vmem %s1, %s189
      %p191 = pneg %p76
      %p192 = pneg %p73
      %p193 = pneg %p97
      %p194 = pneg %p94
      %p195 = pneg %p125
      %p196 = pneg %p122
      %s197 = smul.u32 4, %s20
      %p198 = scmp.lt.s32.totalorder %s197, 7
      %s199 = scalar_select %p198, %s197, 7
      %p200 = scmp.lt.s32.totalorder %s19, 0
      %s201 = scalar_select %p200, %s19, 0
      %s202 = sadd.s32 %s201, %s199
      %s203 = smul.addr %s202, 8
      %s204 = scalar_lea.vmem %s4, %s203
      %s205 = smul.u32 4, %s20
      %p206 = scmp.lt.s32.totalorder %s205, 7
      %s207 = scalar_select %p206, %s205, 7
      %p208 = scmp.lt.s32.totalorder %s19, 0
      %s209 = scalar_select %p208, %s19, 0
      %s210 = smul.addr %s209, 3
      %s211 = smul.addr %s207, 3
      %s212 = sadd.s32 %s210, %s211
      %s213 = smul.addr %s212, 8
      %s214 = scalar_lea.vmem %s0, %s213
      %s215 = smul.u32 4, %s20
      %p216 = scmp.lt.s32.totalorder %s19, 0
      %s217 = scalar_select %p216, %s19, 0
      %s218 = smul.addr %s217, 8
      %s219 = scalar_lea.vmem %s1, %s218
      %s220 = smul.u32 4, %s20
      %p221 = scmp.lt.s32.totalorder %s220, 7
      %s222 = scalar_select %p221, %s220, 7
      %p223 = scmp.lt.s32.totalorder %s19, 0
      %s224 = scalar_select %p223, %s19, 0
      %s225 = sadd.s32 %s224, %s222
      %s226 = smul.addr %s225, 8
      %s227 = scalar_lea.vmem %s4, %s226
      %s228 = smul.u32 4, %s20
      %p229 = scmp.eq.s32.totalorder %s20, 0
      // Predicated region
      $region33: #{decoder_rnnt_forward.1} parent=31 // pred_check
        %p230 = pneg %p229
      $region34: #{decoder_rnnt_forward.1} parent=31 // pred_check_branch
        %232 = sbr.rel (%p230) target = $region36
      $region35: #{decoder_rnnt_forward.1} parent=31 // pred_region
        $region37: #{decoder_rnnt_forward.1} parent=35
          #allocation4 [shape = 's32[1]{0}', space=sflag, size = 0x4, scoped, tag = 'scoped memory for decoder_rnnt_forward.1']
          %p234 = scmp.lt.u32.totalorder 384, 8
          %p235 = pneg %p234
          // Predicated region
          $region38: #{decoder_rnnt_forward.1} parent=37 // pred_check
            _
          $region39: #{decoder_rnnt_forward.1} parent=37 // pred_check_branch
            %237 = sbr.rel (%p234) target = $region41
          $region40: #{decoder_rnnt_forward.1} parent=37 // pred_region
            %s252 = sand.u32 384, 7
            %p253 = scmp.eq.s32.totalorder %s252, 0
            // Predicated region
            $region53: #{decoder_rnnt_forward.1} parent=40 // pred_check
              %p254 = pneg %p253
            $region54: #{decoder_rnnt_forward.1} parent=40 // pred_check_branch
              %256 = sbr.rel (%p254) target = $region56
            $region55: #{decoder_rnnt_forward.1} parent=40 // pred_region
              loop: start=0, step=1, limit=1
              $region57: #{decoder_rnnt_forward.1} parent=55 // loop_pre_header
                _
              $region58: #{decoder_rnnt_forward.1} parent=55 // loop_header
                %s258 = sphi 0, %s262
                %p259 = scmp.ge.s32.totalorder %s258, 1
                %s263 = sphi %s3, %s3
                %s264 = sphi [#allocation3], [#allocation3]
              $region59: #{decoder_rnnt_forward.1} parent=55 // loop_header_branch
                %261 = sbr.rel (%p259) target = $region63
              $region60: #{decoder_rnnt_forward.1} parent=55 // loop_body
                %v265 = vld [vmem:[%s263] sm:$0xff]
                %266 = vst [vmem:[%s264] sm:$0xff] %v265
                %v267 = vld [vmem:[%s263 + $0x8] sm:$0xff]
                %268 = vst [vmem:[%s264 + $0x8] sm:$0xff] %v267
                %v269 = vld [vmem:[%s263 + $0x10] sm:$0xff]
                %270 = vst [vmem:[%s264 + $0x10] sm:$0xff] %v269
                %v271 = vld [vmem:[%s263 + $0x18] sm:$0xff]
                %272 = vst [vmem:[%s264 + $0x18] sm:$0xff] %v271
                %v273 = vld [vmem:[%s263 + $0x20] sm:$0xff]
                %274 = vst [vmem:[%s264 + $0x20] sm:$0xff] %v273
                %v275 = vld [vmem:[%s263 + $0x28] sm:$0xff]
                %276 = vst [vmem:[%s264 + $0x28] sm:$0xff] %v275
                %v277 = vld [vmem:[%s263 + $0x30] sm:$0xff]
                %278 = vst [vmem:[%s264 + $0x30] sm:$0xff] %v277
                %v279 = vld [vmem:[%s263 + $0x38] sm:$0xff]
                %280 = vst [vmem:[%s264 + $0x38] sm:$0xff] %v279
                %v281 = vld [vmem:[%s263 + $0x40] sm:$0xff]
                %282 = vst [vmem:[%s264 + $0x40] sm:$0xff] %v281
                %v283 = vld [vmem:[%s263 + $0x48] sm:$0xff]
                %284 = vst [vmem:[%s264 + $0x48] sm:$0xff] %v283
                %v285 = vld [vmem:[%s263 + $0x50] sm:$0xff]
                %286 = vst [vmem:[%s264 + $0x50] sm:$0xff] %v285
                %v287 = vld [vmem:[%s263 + $0x58] sm:$0xff]
                %288 = vst [vmem:[%s264 + $0x58] sm:$0xff] %v287
                %v289 = vld [vmem:[%s263 + $0x60] sm:$0xff]
                %290 = vst [vmem:[%s264 + $0x60] sm:$0xff] %v289
                %v291 = vld [vmem:[%s263 + $0x68] sm:$0xff]
                %292 = vst [vmem:[%s264 + $0x68] sm:$0xff] %v291
                %v293 = vld [vmem:[%s263 + $0x70] sm:$0xff]
                %294 = vst [vmem:[%s264 + $0x70] sm:$0xff] %v293
                %v295 = vld [vmem:[%s263 + $0x78] sm:$0xff]
                %296 = vst [vmem:[%s264 + $0x78] sm:$0xff] %v295
                %v297 = vld [vmem:[%s263 + $0x80] sm:$0xff]
                %298 = vst [vmem:[%s264 + $0x80] sm:$0xff] %v297
                %v299 = vld [vmem:[%s263 + $0x88] sm:$0xff]
                %300 = vst [vmem:[%s264 + $0x88] sm:$0xff] %v299
                %v301 = vld [vmem:[%s263 + $0x90] sm:$0xff]
                %302 = vst [vmem:[%s264 + $0x90] sm:$0xff] %v301
                %v303 = vld [vmem:[%s263 + $0x98] sm:$0xff]
                %304 = vst [vmem:[%s264 + $0x98] sm:$0xff] %v303
                %v305 = vld [vmem:[%s263 + $0xa0] sm:$0xff]
                %306 = vst [vmem:[%s264 + $0xa0] sm:$0xff] %v305
                %v307 = vld [vmem:[%s263 + $0xa8] sm:$0xff]
                %308 = vst [vmem:[%s264 + $0xa8] sm:$0xff] %v307
                %v309 = vld [vmem:[%s263 + $0xb0] sm:$0xff]
                %310 = vst [vmem:[%s264 + $0xb0] sm:$0xff] %v309
                %v311 = vld [vmem:[%s263 + $0xb8] sm:$0xff]
                %312 = vst [vmem:[%s264 + $0xb8] sm:$0xff] %v311
                %v313 = vld [vmem:[%s263 + $0xc0] sm:$0xff]
                %314 = vst [vmem:[%s264 + $0xc0] sm:$0xff] %v313
                %v315 = vld [vmem:[%s263 + $0xc8] sm:$0xff]
                %316 = vst [vmem:[%s264 + $0xc8] sm:$0xff] %v315
                %v317 = vld [vmem:[%s263 + $0xd0] sm:$0xff]
                %318 = vst [vmem:[%s264 + $0xd0] sm:$0xff] %v317
                %v319 = vld [vmem:[%s263 + $0xd8] sm:$0xff]
                %320 = vst [vmem:[%s264 + $0xd8] sm:$0xff] %v319
                %v321 = vld [vmem:[%s263 + $0xe0] sm:$0xff]
                %322 = vst [vmem:[%s264 + $0xe0] sm:$0xff] %v321
                %v323 = vld [vmem:[%s263 + $0xe8] sm:$0xff]
                %324 = vst [vmem:[%s264 + $0xe8] sm:$0xff] %v323
                %v325 = vld [vmem:[%s263 + $0xf0] sm:$0xff]
                %326 = vst [vmem:[%s264 + $0xf0] sm:$0xff] %v325
                %v327 = vld [vmem:[%s263 + $0xf8] sm:$0xff]
                %328 = vst [vmem:[%s264 + $0xf8] sm:$0xff] %v327
                %v329 = vld [vmem:[%s263 + $0x100] sm:$0xff]
                %330 = vst [vmem:[%s264 + $0x100] sm:$0xff] %v329
                %v331 = vld [vmem:[%s263 + $0x108] sm:$0xff]
                %332 = vst [vmem:[%s264 + $0x108] sm:$0xff] %v331
                %v333 = vld [vmem:[%s263 + $0x110] sm:$0xff]
                %334 = vst [vmem:[%s264 + $0x110] sm:$0xff] %v333
                %v335 = vld [vmem:[%s263 + $0x118] sm:$0xff]
                %336 = vst [vmem:[%s264 + $0x118] sm:$0xff] %v335
                %v337 = vld [vmem:[%s263 + $0x120] sm:$0xff]
                %338 = vst [vmem:[%s264 + $0x120] sm:$0xff] %v337
                %v339 = vld [vmem:[%s263 + $0x128] sm:$0xff]
                %340 = vst [vmem:[%s264 + $0x128] sm:$0xff] %v339
                %v341 = vld [vmem:[%s263 + $0x130] sm:$0xff]
                %342 = vst [vmem:[%s264 + $0x130] sm:$0xff] %v341
                %v343 = vld [vmem:[%s263 + $0x138] sm:$0xff]
                %344 = vst [vmem:[%s264 + $0x138] sm:$0xff] %v343
                %v345 = vld [vmem:[%s263 + $0x140] sm:$0xff]
                %346 = vst [vmem:[%s264 + $0x140] sm:$0xff] %v345
                %v347 = vld [vmem:[%s263 + $0x148] sm:$0xff]
                %348 = vst [vmem:[%s264 + $0x148] sm:$0xff] %v347
                %v349 = vld [vmem:[%s263 + $0x150] sm:$0xff]
                %350 = vst [vmem:[%s264 + $0x150] sm:$0xff] %v349
                %v351 = vld [vmem:[%s263 + $0x158] sm:$0xff]
                %352 = vst [vmem:[%s264 + $0x158] sm:$0xff] %v351
                %v353 = vld [vmem:[%s263 + $0x160] sm:$0xff]
                %354 = vst [vmem:[%s264 + $0x160] sm:$0xff] %v353
                %v355 = vld [vmem:[%s263 + $0x168] sm:$0xff]
                %356 = vst [vmem:[%s264 + $0x168] sm:$0xff] %v355
                %v357 = vld [vmem:[%s263 + $0x170] sm:$0xff]
                %358 = vst [vmem:[%s264 + $0x170] sm:$0xff] %v357
                %v359 = vld [vmem:[%s263 + $0x178] sm:$0xff]
                %360 = vst [vmem:[%s264 + $0x178] sm:$0xff] %v359
              $region61: #{decoder_rnnt_forward.1} parent=55 // loop_footer
                %s262 = sadd.s32 1, %s258
              $region62: #{decoder_rnnt_forward.1} parent=55 // loop_footer_branch
                %257 = sbr.rel target = $region58
              $region63: #{decoder_rnnt_forward.1} parent=55 // loop_exit
                _
            $region56: #{decoder_rnnt_forward.1} parent=40 // pred_fallthru
              _
            %p361 = pneg %p253
            // Predicated region
            $region64: #{decoder_rnnt_forward.1} parent=40 // pred_check
              _
            $region65: #{decoder_rnnt_forward.1} parent=40 // pred_check_branch
              %363 = sbr.rel (%p253) target = $region67
            $region66: #{decoder_rnnt_forward.1} parent=40 // pred_region
              %s364 = sand.u32 384, 7
            $region67: #{decoder_rnnt_forward.1} parent=40 // pred_fallthru
              _
          $region41: #{decoder_rnnt_forward.1} parent=37 // pred_fallthru
            _
          // Predicated region
          $region42: #{decoder_rnnt_forward.1} parent=37 // pred_check
            %p238 = pneg %p234
          $region43: #{decoder_rnnt_forward.1} parent=37 // pred_check_branch
            %240 = sbr.rel (%p238) target = $region45
          $region44: #{decoder_rnnt_forward.1} parent=37 // pred_region
            %s241 = sshllo.u32 0, 384
            loop: start=0, step=1, limit=1
            $region46: #{decoder_rnnt_forward.1} parent=44 // loop_pre_header
              _
            $region47: #{decoder_rnnt_forward.1} parent=44 // loop_header
              %s243 = sphi 0, %s247
              %p244 = scmp.ge.s32.totalorder %s243, 1
              %s248 = sphi %s3, %s3
              %s249 = sphi [#allocation3], [#allocation3]
            $region48: #{decoder_rnnt_forward.1} parent=44 // loop_header_branch
              %246 = sbr.rel (%p244) target = $region52
            $region49: #{decoder_rnnt_forward.1} parent=44 // loop_body
              %v250 = vld [vmem:[%s248] sm:%s241]
              %251 = vst [vmem:[%s249] sm:%s241] %v250
            $region50: #{decoder_rnnt_forward.1} parent=44 // loop_footer
              %s247 = sadd.s32 1, %s243
            $region51: #{decoder_rnnt_forward.1} parent=44 // loop_footer_branch
              %242 = sbr.rel target = $region47
            $region52: #{decoder_rnnt_forward.1} parent=44 // loop_exit
              _
          $region45: #{decoder_rnnt_forward.1} parent=37 // pred_fallthru
            _
          // Predicated region
          $region68: #{decoder_rnnt_forward.1} parent=37 // pred_check
            _
          $region69: #{decoder_rnnt_forward.1} parent=37 // pred_check_branch
            %367 = sbr.rel (0) target = $region71
          $region70: #{decoder_rnnt_forward.1} parent=37 // pred_region
            %368 = vsyncadd [#allocation4], 6144
          $region71: #{decoder_rnnt_forward.1} parent=37 // pred_fallthru
            _
          %s369 = smul.u32 8, 16
          %s370 = smul.u32 %s369, 3
          %s371 = sshll.u32 %s370, 4
          %372 = dma.done [#allocation4], %s371
        %v373 = vld [vmem:[%s219] sm:$0xff]
        %374 = vst [vmem:[#allocation2] sm:$0xff] %v373
      $region36: #{decoder_rnnt_forward.1} parent=31 // pred_fallthru
        _
      %v375 = vld [vmem:[#allocation3] sm:$0xff]
      %v376 = vld [vmem:[#allocation3 + $0x8] sm:$0xff]
      %v377 = vld [vmem:[#allocation3 + $0x10] sm:$0xff]
      %v378 = vld [vmem:[#allocation3 + $0x18] sm:$0xff]
      %v379 = vld [vmem:[#allocation3 + $0x20] sm:$0xff]
      %v380 = vld [vmem:[#allocation3 + $0x28] sm:$0xff]
      %v381 = vld [vmem:[#allocation3 + $0x30] sm:$0xff]
      %v382 = vld [vmem:[#allocation3 + $0x38] sm:$0xff]
      %v383 = vld [vmem:[#allocation3 + $0x40] sm:$0xff]
      %v384 = vld [vmem:[#allocation3 + $0x48] sm:$0xff]
      %v385 = vld [vmem:[#allocation3 + $0x50] sm:$0xff]
      %v386 = vld [vmem:[#allocation3 + $0x58] sm:$0xff]
      %v387 = vld [vmem:[#allocation3 + $0x60] sm:$0xff]
      %v388 = vld [vmem:[#allocation3 + $0x68] sm:$0xff]
      %v389 = vld [vmem:[#allocation3 + $0x70] sm:$0xff]
      %v390 = vld [vmem:[#allocation3 + $0x78] sm:$0xff]
      %v391 = vld [vmem:[#allocation3 + $0x80] sm:$0xff]
      %v392 = vld [vmem:[#allocation3 + $0x88] sm:$0xff]
      %v393 = vld [vmem:[#allocation3 + $0x90] sm:$0xff]
      %v394 = vld [vmem:[#allocation3 + $0x98] sm:$0xff]
      %v395 = vld [vmem:[#allocation3 + $0xa0] sm:$0xff]
      %v396 = vld [vmem:[#allocation3 + $0xa8] sm:$0xff]
      %v397 = vld [vmem:[#allocation3 + $0xb0] sm:$0xff]
      %v398 = vld [vmem:[#allocation3 + $0xb8] sm:$0xff]
      %v399 = vld [vmem:[#allocation3 + $0xc0] sm:$0xff]
      %v400 = vld [vmem:[#allocation3 + $0xc8] sm:$0xff]
      %v401 = vld [vmem:[#allocation3 + $0xd0] sm:$0xff]
      %v402 = vld [vmem:[#allocation3 + $0xd8] sm:$0xff]
      %v403 = vld [vmem:[#allocation3 + $0xe0] sm:$0xff]
      %v404 = vld [vmem:[#allocation3 + $0xe8] sm:$0xff]
      %v405 = vld [vmem:[#allocation3 + $0xf0] sm:$0xff]
      %v406 = vld [vmem:[#allocation3 + $0xf8] sm:$0xff]
      %v407 = vld [vmem:[#allocation3 + $0x100] sm:$0xff]
      %v408 = vld [vmem:[#allocation3 + $0x108] sm:$0xff]
      %v409 = vld [vmem:[#allocation3 + $0x110] sm:$0xff]
      %v410 = vld [vmem:[#allocation3 + $0x118] sm:$0xff]
      %v411 = vld [vmem:[#allocation3 + $0x120] sm:$0xff]
      %v412 = vld [vmem:[#allocation3 + $0x128] sm:$0xff]
      %v413 = vld [vmem:[#allocation3 + $0x130] sm:$0xff]
      %v414 = vld [vmem:[#allocation3 + $0x138] sm:$0xff]
      %v415 = vld [vmem:[#allocation3 + $0x140] sm:$0xff]
      %v416 = vld [vmem:[#allocation3 + $0x148] sm:$0xff]
      %v417 = vld [vmem:[#allocation3 + $0x150] sm:$0xff]
      %v418 = vld [vmem:[#allocation3 + $0x158] sm:$0xff]
      %v419 = vld [vmem:[#allocation3 + $0x160] sm:$0xff]
      %v420 = vld [vmem:[#allocation3 + $0x168] sm:$0xff]
      %v421 = vld [vmem:[#allocation3 + $0x170] sm:$0xff]
      %v422 = vld [vmem:[#allocation3 + $0x178] sm:$0xff]
      %v423 = vld [vmem:[%s2] sm:$0x1]
      %v425 = vlaneseq
      %v426 = vshrl.u32 %v425, 7
      %v427 = vsub.s32 0, %v426
      %v428 = vrot.slane %v423, %v427
      %v430 = vld [vmem:[#allocation2] sm:$0xff]
      %v431 = vld [vmem:[%s214] sm:$0xff]
      %v432 = vld [vmem:[%s214 + $0x8] sm:$0xff]
      %v433 = vld [vmem:[%s214 + $0x10] sm:$0xff]
      %434 = vmatprep.subr.mxu0 %v376
      %435 = vmatpush1.msra.mxu0 %v375
      %436 = vmatprep.subr.mxu0 %v379
      %437 = vmatpush1.msra.mxu0 %v378
      %438 = vmatprep.subr.mxu0 %v382
      %439 = vmatpush1.msra.mxu0 %v381
      %440 = vmatprep.subr.mxu0 %v385
      %441 = vmatpush1.msra.mxu0 %v384
      %442 = vmatprep.subr.mxu0 %v388
      %443 = vmatpush1.msra.mxu0 %v387
      %444 = vmatprep.subr.mxu0 %v391
      %445 = vmatpush1.msra.mxu0 %v390
      %446 = vmatprep.subr.mxu0 %v394
      %447 = vmatpush1.msra.mxu0 %v393
      %448 = vmatprep.subr.mxu0 %v397
      %449 = vmatpush1.msra.mxu0 %v396
      %450 = vmatprep.subr.mxu0 %v400
      %451 = vmatpush1.msra.mxu0 %v399
      %452 = vmatprep.subr.mxu0 %v403
      %453 = vmatpush1.msra.mxu0 %v402
      %454 = vmatprep.subr.mxu0 %v406
      %455 = vmatpush1.msra.mxu0 %v405
      %456 = vmatprep.subr.mxu0 %v409
      %457 = vmatpush1.msra.mxu0 %v408
      %458 = vmatprep.subr.mxu0 %v412
      %459 = vmatpush1.msra.mxu0 %v411
      %460 = vmatprep.subr.mxu0 %v415
      %461 = vmatpush1.msra.mxu0 %v414
      %462 = vmatprep.subr.mxu0 %v418
      %463 = vmatpush1.msra.mxu0 %v417
      %464 = vmatprep.subr.mxu0 %v421
      %465 = vmatpush1.msra.mxu0 %v420
      %466 = vmatprep.subr.mxu0 0.0
      %467 = vmatpush1.msra.mxu0 0.0
      %468 = vmatprep.subr.mxu0 0.0
      %469 = vmatpush1.msra.mxu0 0.0
      %470 = vmatprep.subr.mxu0 0.0
      %471 = vmatpush1.msra.mxu0 0.0
      %472 = vmatprep.subr.mxu0 0.0
      %473 = vmatpush1.msra.mxu0 0.0
      %474 = vmatprep.subr.mxu0 0.0
      %475 = vmatpush1.msra.mxu0 0.0
      %476 = vmatprep.subr.mxu0 0.0
      %477 = vmatpush1.msra.mxu0 0.0
      %478 = vmatprep.subr.mxu0 0.0
      %479 = vmatpush1.msra.mxu0 0.0
      %480 = vmatprep.subr.mxu0 0.0
      %481 = vmatpush1.msra.mxu0 0.0
      %482 = vmatprep.subr.mxu0 0.0
      %483 = vmatpush1.msra.mxu0 0.0
      %484 = vmatprep.subr.mxu0 0.0
      %485 = vmatpush1.msra.mxu0 0.0
      %486 = vmatprep.subr.mxu0 0.0
      %487 = vmatpush1.msra.mxu0 0.0
      %488 = vmatprep.subr.mxu0 0.0
      %489 = vmatpush1.msra.mxu0 0.0
      %490 = vmatprep.subr.mxu0 0.0
      %491 = vmatpush1.msra.mxu0 0.0
      %492 = vmatprep.subr.mxu0 0.0
      %493 = vmatpush1.msra.mxu0 0.0
      %494 = vmatprep.subr.mxu0 0.0
      %495 = vmatpush1.msra.mxu0 0.0
      %496 = vmatprep.subr.mxu0 0.0
      %497 = vmatpush1.msra.mxu0 0.0
      %498 = vmatprep.mubr.f32.mxu0 0.0
      %499 = vmatmul.mubr.f32.gmra.mrb[0].mxu0 %v430
      %v500 = vpop.f32.mrb[0].mxu0
      %v501 = vadd.f32 0.0, %v500
      %v502 = vpop.f32.mrb[0].mxu0
      %v503 = vadd.f32 0.0, %v502
      %504 = vdwg.mxu0
      %505 = vmatprep.subr.mxu0 0.0
      %506 = vmatpush1.msra.mxu0 %v377
      %507 = vmatprep.subr.mxu0 0.0
      %508 = vmatpush1.msra.mxu0 %v380
      %509 = vmatprep.subr.mxu0 0.0
      %510 = vmatpush1.msra.mxu0 %v383
      %511 = vmatprep.subr.mxu0 0.0
      %512 = vmatpush1.msra.mxu0 %v386
      %513 = vmatprep.subr.mxu0 0.0
      %514 = vmatpush1.msra.mxu0 %v389
      %515 = vmatprep.subr.mxu0 0.0
      %516 = vmatpush1.msra.mxu0 %v392
      %517 = vmatprep.subr.mxu0 0.0
      %518 = vmatpush1.msra.mxu0 %v395
      %519 = vmatprep.subr.mxu0 0.0
      %520 = vmatpush1.msra.mxu0 %v398
      %521 = vmatprep.subr.mxu0 0.0
      %522 = vmatpush1.msra.mxu0 %v401
      %523 = vmatprep.subr.mxu0 0.0
      %524 = vmatpush1.msra.mxu0 %v404
      %525 = vmatprep.subr.mxu0 0.0
      %526 = vmatpush1.msra.mxu0 %v407
      %527 = vmatprep.subr.mxu0 0.0
      %528 = vmatpush1.msra.mxu0 %v410
      %529 = vmatprep.subr.mxu0 0.0
      %530 = vmatpush1.msra.mxu0 %v413
      %531 = vmatprep.subr.mxu0 0.0
      %532 = vmatpush1.msra.mxu0 %v416
      %533 = vmatprep.subr.mxu0 0.0
      %534 = vmatpush1.msra.mxu0 %v419
      %535 = vmatprep.subr.mxu0 0.0
      %536 = vmatpush1.msra.mxu0 %v422
      %537 = vmatprep.subr.mxu0 0.0
      %538 = vmatpush1.msra.mxu0 0.0
      %539 = vmatprep.subr.mxu0 0.0
      %540 = vmatpush1.msra.mxu0 0.0
      %541 = vmatprep.subr.mxu0 0.0
      %542 = vmatpush1.msra.mxu0 0.0
      %543 = vmatprep.subr.mxu0 0.0
      %544 = vmatpush1.msra.mxu0 0.0
      %545 = vmatprep.subr.mxu0 0.0
      %546 = vmatpush1.msra.mxu0 0.0
      %547 = vmatprep.subr.mxu0 0.0
      %548 = vmatpush1.msra.mxu0 0.0
      %549 = vmatprep.subr.mxu0 0.0
      %550 = vmatpush1.msra.mxu0 0.0
      %551 = vmatprep.subr.mxu0 0.0
      %552 = vmatpush1.msra.mxu0 0.0
      %553 = vmatprep.subr.mxu0 0.0
      %554 = vmatpush1.msra.mxu0 0.0
      %555 = vmatprep.subr.mxu0 0.0
      %556 = vmatpush1.msra.mxu0 0.0
      %557 = vmatprep.subr.mxu0 0.0
      %558 = vmatpush1.msra.mxu0 0.0
      %559 = vmatprep.subr.mxu0 0.0
      %560 = vmatpush1.msra.mxu0 0.0
      %561 = vmatprep.subr.mxu0 0.0
      %562 = vmatpush1.msra.mxu0 0.0
      %563 = vmatprep.subr.mxu0 0.0
      %564 = vmatpush1.msra.mxu0 0.0
      %565 = vmatprep.subr.mxu0 0.0
      %566 = vmatpush1.msra.mxu0 0.0
      %567 = vmatprep.subr.mxu0 0.0
      %568 = vmatpush1.msra.mxu0 0.0
      %569 = vmatprep.mubr.f32.mxu0 0.0
      %570 = vmatmul.mubr.f32.gmra.mrb[0].mxu0 %v430
      %v571 = vpop.f32.mrb[0].mxu0
      %v572 = vadd.f32 0.0, %v571
      %v573 = vpop.f32.mrb[0].mxu0
      %574 = vdwg.mxu0
      %v575 = vadd.f32 %v431, %v501
      %v576 = vadd.f32 %v432, %v503
      %v577 = vxor.u32 %v575, 2147483648
      %v578 = vxor.u32 %v576, 2147483648
      %v579 = vmul.f32 %v577, 1.442695
      %v580 = vpow.pop %v579
      %v581 = vmul.f32 %v578, 1.442695
      %v582 = vpow.pop %v581
      %v583 = vadd.f32 %v580, 1.0
      %v584 = vadd.f32 %v582, 1.0
      %v585 = vrcp.pop %v583
      %v586 = vmul.f32 1.0, %v585
      %v587 = vrcp.pop %v584
      %v588 = vmul.f32 1.0, %v587
      %v589 = vadd.f32 %v572, %v428
      %v590 = vmul.f32 %v586, %v589
      %v591 = vadd.f32 %v433, %v590
      %v592 = vtanh.pop %v591
      %v593 = vsub.f32 1.0, %v588
      %v594 = vmul.f32 %v593, %v592
      %v595 = vmul.f32 %v588, %v430
      %v596 = vadd.f32 %v594, %v595
      %597 = vst [vmem:[%s227] sm:$0xff] %v596
      %s598 = scalar_lea.vmem %s214, 24
      %v599 = vld [vmem:[%s598] sm:$0xff]
      %v600 = vld [vmem:[%s598 + $0x8] sm:$0xff]
      %v601 = vld [vmem:[%s598 + $0x10] sm:$0xff]
      %602 = vmatprep.subr.mxu0 %v376
      %603 = vmatpush1.msra.mxu0 %v375
      %604 = vmatprep.subr.mxu0 %v379
      %605 = vmatpush1.msra.mxu0 %v378
      %606 = vmatprep.subr.mxu0 %v382
      %607 = vmatpush1.msra.mxu0 %v381
      %608 = vmatprep.subr.mxu0 %v385
      %609 = vmatpush1.msra.mxu0 %v384
      %610 = vmatprep.subr.mxu0 %v388
      %611 = vmatpush1.msra.mxu0 %v387
      %612 = vmatprep.subr.mxu0 %v391
      %613 = vmatpush1.msra.mxu0 %v390
      %614 = vmatprep.subr.mxu0 %v394
      %615 = vmatpush1.msra.mxu0 %v393
      %616 = vmatprep.subr.mxu0 %v397
      %617 = vmatpush1.msra.mxu0 %v396
      %618 = vmatprep.subr.mxu0 %v400
      %619 = vmatpush1.msra.mxu0 %v399
      %620 = vmatprep.subr.mxu0 %v403
      %621 = vmatpush1.msra.mxu0 %v402
      %622 = vmatprep.subr.mxu0 %v406
      %623 = vmatpush1.msra.mxu0 %v405
      %624 = vmatprep.subr.mxu0 %v409
      %625 = vmatpush1.msra.mxu0 %v408
      %626 = vmatprep.subr.mxu0 %v412
      %627 = vmatpush1.msra.mxu0 %v411
      %628 = vmatprep.subr.mxu0 %v415
      %629 = vmatpush1.msra.mxu0 %v414
      %630 = vmatprep.subr.mxu0 %v418
      %631 = vmatpush1.msra.mxu0 %v417
      %632 = vmatprep.subr.mxu0 %v421
      %633 = vmatpush1.msra.mxu0 %v420
      %634 = vmatprep.subr.mxu0 0.0
      %635 = vmatpush1.msra.mxu0 0.0
      %636 = vmatprep.subr.mxu0 0.0
      %637 = vmatpush1.msra.mxu0 0.0
      %638 = vmatprep.subr.mxu0 0.0
      %639 = vmatpush1.msra.mxu0 0.0
      %640 = vmatprep.subr.mxu0 0.0
      %641 = vmatpush1.msra.mxu0 0.0
      %642 = vmatprep.subr.mxu0 0.0
      %643 = vmatpush1.msra.mxu0 0.0
      %644 = vmatprep.subr.mxu0 0.0
      %645 = vmatpush1.msra.mxu0 0.0
      %646 = vmatprep.subr.mxu0 0.0
      %647 = vmatpush1.msra.mxu0 0.0
      %648 = vmatprep.subr.mxu0 0.0
      %649 = vmatpush1.msra.mxu0 0.0
      %650 = vmatprep.subr.mxu0 0.0
      %651 = vmatpush1.msra.mxu0 0.0
      %652 = vmatprep.subr.mxu0 0.0
      %653 = vmatpush1.msra.mxu0 0.0
      %654 = vmatprep.subr.mxu0 0.0
      %655 = vmatpush1.msra.mxu0 0.0
      %656 = vmatprep.subr.mxu0 0.0
      %657 = vmatpush1.msra.mxu0 0.0
      %658 = vmatprep.subr.mxu0 0.0
      %659 = vmatpush1.msra.mxu0 0.0
      %660 = vmatprep.subr.mxu0 0.0
      %661 = vmatpush1.msra.mxu0 0.0
      %662 = vmatprep.subr.mxu0 0.0
      %663 = vmatpush1.msra.mxu0 0.0
      %664 = vmatprep.subr.mxu0 0.0
      %665 = vmatpush1.msra.mxu0 0.0
      %666 = vmatprep.mubr.f32.mxu0 0.0
      %667 = vmatmul.mubr.f32.gmra.mrb[0].mxu0 %v596
      %v668 = vpop.f32.mrb[0].mxu0
      %v669 = vadd.f32 0.0, %v668
      %v670 = vpop.f32.mrb[0].mxu0
      %v671 = vadd.f32 0.0, %v670
      %672 = vdwg.mxu0
      %673 = vmatprep.subr.mxu0 0.0
      %674 = vmatpush1.msra.mxu0 %v377
      %675 = vmatprep.subr.mxu0 0.0
      %676 = vmatpush1.msra.mxu0 %v380
      %677 = vmatprep.subr.mxu0 0.0
      %678 = vmatpush1.msra.mxu0 %v383
      %679 = vmatprep.subr.mxu0 0.0
      %680 = vmatpush1.msra.mxu0 %v386
      %681 = vmatprep.subr.mxu0 0.0
      %682 = vmatpush1.msra.mxu0 %v389
      %683 = vmatprep.subr.mxu0 0.0
      %684 = vmatpush1.msra.mxu0 %v392
      %685 = vmatprep.subr.mxu0 0.0
      %686 = vmatpush1.msra.mxu0 %v395
      %687 = vmatprep.subr.mxu0 0.0
      %688 = vmatpush1.msra.mxu0 %v398
      %689 = vmatprep.subr.mxu0 0.0
      %690 = vmatpush1.msra.mxu0 %v401
      %691 = vmatprep.subr.mxu0 0.0
      %692 = vmatpush1.msra.mxu0 %v404
      %693 = vmatprep.subr.mxu0 0.0
      %694 = vmatpush1.msra.mxu0 %v407
      %695 = vmatprep.subr.mxu0 0.0
      %696 = vmatpush1.msra.mxu0 %v410
      %697 = vmatprep.subr.mxu0 0.0
      %698 = vmatpush1.msra.mxu0 %v413
      %699 = vmatprep.subr.mxu0 0.0
      %700 = vmatpush1.msra.mxu0 %v416
      %701 = vmatprep.subr.mxu0 0.0
      %702 = vmatpush1.msra.mxu0 %v419
      %703 = vmatprep.subr.mxu0 0.0
      %704 = vmatpush1.msra.mxu0 %v422
      %705 = vmatprep.subr.mxu0 0.0
      %706 = vmatpush1.msra.mxu0 0.0
      %707 = vmatprep.subr.mxu0 0.0
      %708 = vmatpush1.msra.mxu0 0.0
      %709 = vmatprep.subr.mxu0 0.0
      %710 = vmatpush1.msra.mxu0 0.0
      %711 = vmatprep.subr.mxu0 0.0
      %712 = vmatpush1.msra.mxu0 0.0
      %713 = vmatprep.subr.mxu0 0.0
      %714 = vmatpush1.msra.mxu0 0.0
      %715 = vmatprep.subr.mxu0 0.0
      %716 = vmatpush1.msra.mxu0 0.0
      %717 = vmatprep.subr.mxu0 0.0
      %718 = vmatpush1.msra.mxu0 0.0
      %719 = vmatprep.subr.mxu0 0.0
      %720 = vmatpush1.msra.mxu0 0.0
      %721 = vmatprep.subr.mxu0 0.0
      %722 = vmatpush1.msra.mxu0 0.0
      %723 = vmatprep.subr.mxu0 0.0
      %724 = vmatpush1.msra.mxu0 0.0
      %725 = vmatprep.subr.mxu0 0.0
      %726 = vmatpush1.msra.mxu0 0.0
      %727 = vmatprep.subr.mxu0 0.0
      %728 = vmatpush1.msra.mxu0 0.0
      %729 = vmatprep.subr.mxu0 0.0
      %730 = vmatpush1.msra.mxu0 0.0
      %731 = vmatprep.subr.mxu0 0.0
      %732 = vmatpush1.msra.mxu0 0.0
      %733 = vmatprep.subr.mxu0 0.0
      %734 = vmatpush1.msra.mxu0 0.0
      %735 = vmatprep.subr.mxu0 0.0
      %736 = vmatpush1.msra.mxu0 0.0
      %737 = vmatprep.mubr.f32.mxu0 0.0
      %738 = vmatmul.mubr.f32.gmra.mrb[0].mxu0 %v596
      %v739 = vpop.f32.mrb[0].mxu0
      %v740 = vadd.f32 0.0, %v739
      %v741 = vpop.f32.mrb[0].mxu0
      %742 = vdwg.mxu0
      %v743 = vadd.f32 %v599, %v669
      %v744 = vadd.f32 %v600, %v671
      %v745 = vxor.u32 %v743, 2147483648
      %v746 = vxor.u32 %v744, 2147483648
      %v747 = vmul.f32 %v745, 1.442695
      %v748 = vpow.pop %v747
      %v749 = vmul.f32 %v746, 1.442695
      %v750 = vpow.pop %v749
      %v751 = vadd.f32 %v748, 1.0
      %v752 = vadd.f32 %v750, 1.0
      %v753 = vrcp.pop %v751
      %v754 = vmul.f32 1.0, %v753
      %v755 = vrcp.pop %v752
      %v756 = vmul.f32 1.0, %v755
      %v757 = vadd.f32 %v740, %v428
      %v758 = vmul.f32 %v754, %v757
      %v759 = vadd.f32 %v601, %v758
      %v760 = vtanh.pop %v759
      %v761 = vsub.f32 1.0, %v756
      %v762 = vmul.f32 %v761, %v760
      %v763 = vmul.f32 %v756, %v596
      %v764 = vadd.f32 %v762, %v763
      %s765 = scalar_lea.vmem %s227, 8
      %766 = vst [vmem:[%s765] sm:$0xff] %v764
      %s767 = scalar_lea.vmem %s214, 48
      %v768 = vld [vmem:[%s767] sm:$0xff]
      %v769 = vld [vmem:[%s767 + $0x8] sm:$0xff]
      %v770 = vld [vmem:[%s767 + $0x10] sm:$0xff]
      %771 = vmatprep.subr.mxu0 %v376
      %772 = vmatpush1.msra.mxu0 %v375
      %773 = vmatprep.subr.mxu0 %v379
      %774 = vmatpush1.msra.mxu0 %v378
      %775 = vmatprep.subr.mxu0 %v382
      %776 = vmatpush1.msra.mxu0 %v381
      %777 = vmatprep.subr.mxu0 %v385
      %778 = vmatpush1.msra.mxu0 %v384
      %779 = vmatprep.subr.mxu0 %v388
      %780 = vmatpush1.msra.mxu0 %v387
      %781 = vmatprep.subr.mxu0 %v391
      %782 = vmatpush1.msra.mxu0 %v390
      %783 = vmatprep.subr.mxu0 %v394
      %784 = vmatpush1.msra.mxu0 %v393
      %785 = vmatprep.subr.mxu0 %v397
      %786 = vmatpush1.msra.mxu0 %v396
      %787 = vmatprep.subr.mxu0 %v400
      %788 = vmatpush1.msra.mxu0 %v399
      %789 = vmatprep.subr.mxu0 %v403
      %790 = vmatpush1.msra.mxu0 %v402
      %791 = vmatprep.subr.mxu0 %v406
      %792 = vmatpush1.msra.mxu0 %v405
      %793 = vmatprep.subr.mxu0 %v409
      %794 = vmatpush1.msra.mxu0 %v408
      %795 = vmatprep.subr.mxu0 %v412
      %796 = vmatpush1.msra.mxu0 %v411
      %797 = vmatprep.subr.mxu0 %v415
      %798 = vmatpush1.msra.mxu0 %v414
      %799 = vmatprep.subr.mxu0 %v418
      %800 = vmatpush1.msra.mxu0 %v417
      %801 = vmatprep.subr.mxu0 %v421
      %802 = vmatpush1.msra.mxu0 %v420
      %803 = vmatprep.subr.mxu0 0.0
      %804 = vmatpush1.msra.mxu0 0.0
      %805 = vmatprep.subr.mxu0 0.0
      %806 = vmatpush1.msra.mxu0 0.0
      %807 = vmatprep.subr.mxu0 0.0
      %808 = vmatpush1.msra.mxu0 0.0
      %809 = vmatprep.subr.mxu0 0.0
      %810 = vmatpush1.msra.mxu0 0.0
      %811 = vmatprep.subr.mxu0 0.0
      %812 = vmatpush1.msra.mxu0 0.0
      %813 = vmatprep.subr.mxu0 0.0
      %814 = vmatpush1.msra.mxu0 0.0
      %815 = vmatprep.subr.mxu0 0.0
      %816 = vmatpush1.msra.mxu0 0.0
      %817 = vmatprep.subr.mxu0 0.0
      %818 = vmatpush1.msra.mxu0 0.0
      %819 = vmatprep.subr.mxu0 0.0
      %820 = vmatpush1.msra.mxu0 0.0
      %821 = vmatprep.subr.mxu0 0.0
      %822 = vmatpush1.msra.mxu0 0.0
      %823 = vmatprep.subr.mxu0 0.0
      %824 = vmatpush1.msra.mxu0 0.0
      %825 = vmatprep.subr.mxu0 0.0
      %826 = vmatpush1.msra.mxu0 0.0
      %827 = vmatprep.subr.mxu0 0.0
      %828 = vmatpush1.msra.mxu0 0.0
      %829 = vmatprep.subr.mxu0 0.0
      %830 = vmatpush1.msra.mxu0 0.0
      %831 = vmatprep.subr.mxu0 0.0
      %832 = vmatpush1.msra.mxu0 0.0
      %833 = vmatprep.subr.mxu0 0.0
      %834 = vmatpush1.msra.mxu0 0.0
      %835 = vmatprep.mubr.f32.mxu0 0.0
      %836 = vmatmul.mubr.f32.gmra.mrb[0].mxu0 %v764
      %v837 = vpop.f32.mrb[0].mxu0
      %v838 = vadd.f32 0.0, %v837
      %v839 = vpop.f32.mrb[0].mxu0
      %v840 = vadd.f32 0.0, %v839
      %841 = vdwg.mxu0
      %842 = vmatprep.subr.mxu0 0.0
      %843 = vmatpush1.msra.mxu0 %v377
      %844 = vmatprep.subr.mxu0 0.0
      %845 = vmatpush1.msra.mxu0 %v380
      %846 = vmatprep.subr.mxu0 0.0
      %847 = vmatpush1.msra.mxu0 %v383
      %848 = vmatprep.subr.mxu0 0.0
      %849 = vmatpush1.msra.mxu0 %v386
      %850 = vmatprep.subr.mxu0 0.0
      %851 = vmatpush1.msra.mxu0 %v389
      %852 = vmatprep.subr.mxu0 0.0
      %853 = vmatpush1.msra.mxu0 %v392
      %854 = vmatprep.subr.mxu0 0.0
      %855 = vmatpush1.msra.mxu0 %v395
      %856 = vmatprep.subr.mxu0 0.0
      %857 = vmatpush1.msra.mxu0 %v398
      %858 = vmatprep.subr.mxu0 0.0
      %859 = vmatpush1.msra.mxu0 %v401
      %860 = vmatprep.subr.mxu0 0.0
      %861 = vmatpush1.msra.mxu0 %v404
      %862 = vmatprep.subr.mxu0 0.0
      %863 = vmatpush1.msra.mxu0 %v407
      %864 = vmatprep.subr.mxu0 0.0
      %865 = vmatpush1.msra.mxu0 %v410
      %866 = vmatprep.subr.mxu0 0.0
      %867 = vmatpush1.msra.mxu0 %v413
      %868 = vmatprep.subr.mxu0 0.0
      %869 = vmatpush1.msra.mxu0 %v416
      %870 = vmatprep.subr.mxu0 0.0
      %871 = vmatpush1.msra.mxu0 %v419
      %872 = vmatprep.subr.mxu0 0.0
      %873 = vmatpush1.msra.mxu0 %v422
      %874 = vmatprep.subr.mxu0 0.0
      %875 = vmatpush1.msra.mxu0 0.0
      %876 = vmatprep.subr.mxu0 0.0
      %877 = vmatpush1.msra.mxu0 0.0
      %878 = vmatprep.subr.mxu0 0.0
      %879 = vmatpush1.msra.mxu0 0.0
      %880 = vmatprep.subr.mxu0 0.0
      %881 = vmatpush1.msra.mxu0 0.0
      %882 = vmatprep.subr.mxu0 0.0
      %883 = vmatpush1.msra.mxu0 0.0
      %884 = vmatprep.subr.mxu0 0.0
      %885 = vmatpush1.msra.mxu0 0.0
      %886 = vmatprep.subr.mxu0 0.0
      %887 = vmatpush1.msra.mxu0 0.0
      %888 = vmatprep.subr.mxu0 0.0
      %889 = vmatpush1.msra.mxu0 0.0
      %890 = vmatprep.subr.mxu0 0.0
      %891 = vmatpush1.msra.mxu0 0.0
      %892 = vmatprep.subr.mxu0 0.0
      %893 = vmatpush1.msra.mxu0 0.0
      %894 = vmatprep.subr.mxu0 0.0
      %895 = vmatpush1.msra.mxu0 0.0
      %896 = vmatprep.subr.mxu0 0.0
      %897 = vmatpush1.msra.mxu0 0.0
      %898 = vmatprep.subr.mxu0 0.0
      %899 = vmatpush1.msra.mxu0 0.0
      %900 = vmatprep.subr.mxu0 0.0
      %901 = vmatpush1.msra.mxu0 0.0
      %902 = vmatprep.subr.mxu0 0.0
      %903 = vmatpush1.msra.mxu0 0.0
      %904 = vmatprep.subr.mxu0 0.0
      %905 = vmatpush1.msra.mxu0 0.0
      %906 = vmatprep.mubr.f32.mxu0 0.0
      %907 = vmatmul.mubr.f32.gmra.mrb[0].mxu0 %v764
      %v908 = vpop.f32.mrb[0].mxu0
      %v909 = vadd.f32 0.0, %v908
      %v910 = vpop.f32.mrb[0].mxu0
      %911 = vdwg.mxu0
      %v912 = vadd.f32 %v768, %v838
      %v913 = vadd.f32 %v769, %v840
      %v914 = vxor.u32 %v912, 2147483648
      %v915 = vxor.u32 %v913, 2147483648
      %v916 = vmul.f32 %v914, 1.442695
      %v917 = vpow.pop %v916
      %v918 = vmul.f32 %v915, 1.442695
      %v919 = vpow.pop %v918
      %v920 = vadd.f32 %v917, 1.0
      %v921 = vadd.f32 %v919, 1.0
      %v922 = vrcp.pop %v920
      %v923 = vmul.f32 1.0, %v922
      %v924 = vrcp.pop %v921
      %v925 = vmul.f32 1.0, %v924
      %v926 = vadd.f32 %v909, %v428
      %v927 = vmul.f32 %v923, %v926
      %v928 = vadd.f32 %v770, %v927
      %v929 = vtanh.pop %v928
      %v930 = vsub.f32 1.0, %v925
      %v931 = vmul.f32 %v930, %v929
      %v932 = vmul.f32 %v925, %v764
      %v933 = vadd.f32 %v931, %v932
      %s934 = scalar_lea.vmem %s227, 16
      %935 = vst [vmem:[%s934] sm:$0xff] %v933
      %s936 = scalar_lea.vmem %s214, 72
      %v937 = vld [vmem:[%s936] sm:$0xff]
      %v938 = vld [vmem:[%s936 + $0x8] sm:$0xff]
      %v939 = vld [vmem:[%s936 + $0x10] sm:$0xff]
      %940 = vmatprep.subr.mxu0 %v376
      %941 = vmatpush1.msra.mxu0 %v375
      %942 = vmatprep.subr.mxu0 %v379
      %943 = vmatpush1.msra.mxu0 %v378
      %944 = vmatprep.subr.mxu0 %v382
      %945 = vmatpush1.msra.mxu0 %v381
      %946 = vmatprep.subr.mxu0 %v385
      %947 = vmatpush1.msra.mxu0 %v384
      %948 = vmatprep.subr.mxu0 %v388
      %949 = vmatpush1.msra.mxu0 %v387
      %950 = vmatprep.subr.mxu0 %v391
      %951 = vmatpush1.msra.mxu0 %v390
      %952 = vmatprep.subr.mxu0 %v394
      %953 = vmatpush1.msra.mxu0 %v393
      %954 = vmatprep.subr.mxu0 %v397
      %955 = vmatpush1.msra.mxu0 %v396
      %956 = vmatprep.subr.mxu0 %v400
      %957 = vmatpush1.msra.mxu0 %v399
      %958 = vmatprep.subr.mxu0 %v403
      %959 = vmatpush1.msra.mxu0 %v402
      %960 = vmatprep.subr.mxu0 %v406
      %961 = vmatpush1.msra.mxu0 %v405
      %962 = vmatprep.subr.mxu0 %v409
      %963 = vmatpush1.msra.mxu0 %v408
      %964 = vmatprep.subr.mxu0 %v412
      %965 = vmatpush1.msra.mxu0 %v411
      %966 = vmatprep.subr.mxu0 %v415
      %967 = vmatpush1.msra.mxu0 %v414
      %968 = vmatprep.subr.mxu0 %v418
      %969 = vmatpush1.msra.mxu0 %v417
      %970 = vmatprep.subr.mxu0 %v421
      %971 = vmatpush1.msra.mxu0 %v420
      %972 = vmatprep.subr.mxu0 0.0
      %973 = vmatpush1.msra.mxu0 0.0
      %974 = vmatprep.subr.mxu0 0.0
      %975 = vmatpush1.msra.mxu0 0.0
      %976 = vmatprep.subr.mxu0 0.0
      %977 = vmatpush1.msra.mxu0 0.0
      %978 = vmatprep.subr.mxu0 0.0
      %979 = vmatpush1.msra.mxu0 0.0
      %980 = vmatprep.subr.mxu0 0.0
      %981 = vmatpush1.msra.mxu0 0.0
      %982 = vmatprep.subr.mxu0 0.0
      %983 = vmatpush1.msra.mxu0 0.0
      %984 = vmatprep.subr.mxu0 0.0
      %985 = vmatpush1.msra.mxu0 0.0
      %986 = vmatprep.subr.mxu0 0.0
      %987 = vmatpush1.msra.mxu0 0.0
      %988 = vmatprep.subr.mxu0 0.0
      %989 = vmatpush1.msra.mxu0 0.0
      %990 = vmatprep.subr.mxu0 0.0
      %991 = vmatpush1.msra.mxu0 0.0
      %992 = vmatprep.subr.mxu0 0.0
      %993 = vmatpush1.msra.mxu0 0.0
      %994 = vmatprep.subr.mxu0 0.0
      %995 = vmatpush1.msra.mxu0 0.0
      %996 = vmatprep.subr.mxu0 0.0
      %997 = vmatpush1.msra.mxu0 0.0
      %998 = vmatprep.subr.mxu0 0.0
      %999 = vmatpush1.msra.mxu0 0.0
      %1000 = vmatprep.subr.mxu0 0.0
      %1001 = vmatpush1.msra.mxu0 0.0
      %1002 = vmatprep.subr.mxu0 0.0
      %1003 = vmatpush1.msra.mxu0 0.0
      %1004 = vmatprep.mubr.f32.mxu0 0.0
      %1005 = vmatmul.mubr.f32.gmra.mrb[0].mxu0 %v933
      %v1006 = vpop.f32.mrb[0].mxu0
      %v1007 = vadd.f32 0.0, %v1006
      %v1008 = vpop.f32.mrb[0].mxu0
      %v1009 = vadd.f32 0.0, %v1008
      %1010 = vdwg.mxu0
      %1011 = vmatprep.subr.mxu0 0.0
      %1012 = vmatpush1.msra.mxu0 %v377
      %1013 = vmatprep.subr.mxu0 0.0
      %1014 = vmatpush1.msra.mxu0 %v380
      %1015 = vmatprep.subr.mxu0 0.0
      %1016 = vmatpush1.msra.mxu0 %v383
      %1017 = vmatprep.subr.mxu0 0.0
      %1018 = vmatpush1.msra.mxu0 %v386
      %1019 = vmatprep.subr.mxu0 0.0
      %1020 = vmatpush1.msra.mxu0 %v389
      %1021 = vmatprep.subr.mxu0 0.0
      %1022 = vmatpush1.msra.mxu0 %v392
      %1023 = vmatprep.subr.mxu0 0.0
      %1024 = vmatpush1.msra.mxu0 %v395
      %1025 = vmatprep.subr.mxu0 0.0
      %1026 = vmatpush1.msra.mxu0 %v398
      %1027 = vmatprep.subr.mxu0 0.0
      %1028 = vmatpush1.msra.mxu0 %v401
      %1029 = vmatprep.subr.mxu0 0.0
      %1030 = vmatpush1.msra.mxu0 %v404
      %1031 = vmatprep.subr.mxu0 0.0
      %1032 = vmatpush1.msra.mxu0 %v407
      %1033 = vmatprep.subr.mxu0 0.0
      %1034 = vmatpush1.msra.mxu0 %v410
      %1035 = vmatprep.subr.mxu0 0.0
      %1036 = vmatpush1.msra.mxu0 %v413
      %1037 = vmatprep.subr.mxu0 0.0
      %1038 = vmatpush1.msra.mxu0 %v416
      %1039 = vmatprep.subr.mxu0 0.0
      %1040 = vmatpush1.msra.mxu0 %v419
      %1041 = vmatprep.subr.mxu0 0.0
      %1042 = vmatpush1.msra.mxu0 %v422
      %1043 = vmatprep.subr.mxu0 0.0
      %1044 = vmatpush1.msra.mxu0 0.0
      %1045 = vmatprep.subr.mxu0 0.0
      %1046 = vmatpush1.msra.mxu0 0.0
      %1047 = vmatprep.subr.mxu0 0.0
      %1048 = vmatpush1.msra.mxu0 0.0
      %1049 = vmatprep.subr.mxu0 0.0
      %1050 = vmatpush1.msra.mxu0 0.0
      %1051 = vmatprep.subr.mxu0 0.0
      %1052 = vmatpush1.msra.mxu0 0.0
      %1053 = vmatprep.subr.mxu0 0.0
      %1054 = vmatpush1.msra.mxu0 0.0
      %1055 = vmatprep.subr.mxu0 0.0
      %1056 = vmatpush1.msra.mxu0 0.0
      %1057 = vmatprep.subr.mxu0 0.0
      %1058 = vmatpush1.msra.mxu0 0.0
      %1059 = vmatprep.subr.mxu0 0.0
      %1060 = vmatpush1.msra.mxu0 0.0
      %1061 = vmatprep.subr.mxu0 0.0
      %1062 = vmatpush1.msra.mxu0 0.0
      %1063 = vmatprep.subr.mxu0 0.0
      %1064 = vmatpush1.msra.mxu0 0.0
      %1065 = vmatprep.subr.mxu0 0.0
      %1066 = vmatpush1.msra.mxu0 0.0
      %1067 = vmatprep.subr.mxu0 0.0
      %1068 = vmatpush1.msra.mxu0 0.0
      %1069 = vmatprep.subr.mxu0 0.0
      %1070 = vmatpush1.msra.mxu0 0.0
      %1071 = vmatprep.subr.mxu0 0.0
      %1072 = vmatpush1.msra.mxu0 0.0
      %1073 = vmatprep.subr.mxu0 0.0
      %1074 = vmatpush1.msra.mxu0 0.0
      %1075 = vmatprep.mubr.f32.mxu0 0.0
      %1076 = vmatmul.mubr.f32.gmra.mrb[0].mxu0 %v933
      %v1077 = vpop.f32.mrb[0].mxu0
      %v1078 = vadd.f32 0.0, %v1077
      %v1079 = vpop.f32.mrb[0].mxu0
      %1080 = vdwg.mxu0
      %v1081 = vadd.f32 %v937, %v1007
      %v1082 = vadd.f32 %v938, %v1009
      %v1083 = vxor.u32 %v1081, 2147483648
      %v1084 = vxor.u32 %v1082, 2147483648
      %v1085 = vmul.f32 %v1083, 1.442695
      %v1086 = vpow.pop %v1085
      %v1087 = vmul.f32 %v1084, 1.442695
      %v1088 = vpow.pop %v1087
      %v1089 = vadd.f32 %v1086, 1.0
      %v1090 = vadd.f32 %v1088, 1.0
      %v1091 = vrcp.pop %v1089
      %v1092 = vmul.f32 1.0, %v1091
      %v1093 = vrcp.pop %v1090
      %v1094 = vmul.f32 1.0, %v1093
      %v1095 = vadd.f32 %v1078, %v428
      %v1096 = vmul.f32 %v1092, %v1095
      %v1097 = vadd.f32 %v939, %v1096
      %v1098 = vtanh.pop %v1097
      %v1099 = vsub.f32 1.0, %v1094
      %v1100 = vmul.f32 %v1099, %v1098
      %v1101 = vmul.f32 %v1094, %v933
      %v1102 = vadd.f32 %v1100, %v1101
      %s1103 = scalar_lea.vmem %s227, 24
      %1104 = vst [vmem:[%s1103] sm:$0xff] %v1102
      %1105 = vst [vmem:[#allocation2] sm:$0xff] %v1102
      %s1106 = smul.u32 4, %s20
      %p1107 = scmp.lt.s32.totalorder %s1106, 7
      %s1108 = scalar_select %p1107, %s1106, 7
      %p1109 = scmp.lt.s32.totalorder %s19, 0
      %s1110 = scalar_select %p1109, %s19, 0
      %s1111 = sadd.s32 %s1110, %s1108
      %s1112 = smul.addr %s1111, 8
      %s1113 = scalar_lea.vmem %s4, %s1112
      // Predicated region
      $region72: #{decoder_rnnt_forward.1} parent=31 // pred_check
        %p1114 = pneg %p122
      $region73: #{decoder_rnnt_forward.1} parent=31 // pred_check_branch
        %1116 = sbr.rel (%p1114) target = $region75
      $region74: #{decoder_rnnt_forward.1} parent=31 // pred_region
        %s1117 = smul.u32 4, %s20
      $region75: #{decoder_rnnt_forward.1} parent=31 // pred_fallthru
        _
    $region32: #{decoder_rnnt_forward.1} parent=5 // pred_fallthru
      _
    %p1118 = scmp.le.s32.totalorder 2, %s10
    // Predicated region
    $region76: #{decoder_rnnt_forward.1} parent=5 // pred_check
      %p1119 = pneg %p1118
    $region77: #{decoder_rnnt_forward.1} parent=5 // pred_check_branch
      %1121 = sbr.rel (%p1119) target = $region79
    $region78: #{decoder_rnnt_forward.1} parent=5 // pred_region
      %s1122 = ssub.s32 %s10, 2
      // Predicated region
      $region80: #{decoder_rnnt_forward.1} parent=78 // pred_check
        %p1123 = pneg %p128
      $region81: #{decoder_rnnt_forward.1} parent=78 // pred_check_branch
        %1125 = sbr.rel (%p1123) target = $region83
      $region82: #{decoder_rnnt_forward.1} parent=78 // pred_region
        %s1126 = smul.u32 4, %s22
        %p1127 = scmp.lt.s32.totalorder %s1126, 7
        %s1128 = scalar_select %p1127, %s1126, 7
        %p1129 = scmp.lt.s32.totalorder %s21, 0
        %s1130 = scalar_select %p1129, %s21, 0
        %s1131 = sadd.s32 %s1130, %s1128
        %s1132 = smul.addr %s1131, 8
        %s1133 = scalar_lea.vmem %s4, %s1132
      $region83: #{decoder_rnnt_forward.1} parent=78 // pred_fallthru
        _
    $region79: #{decoder_rnnt_forward.1} parent=5 // pred_fallthru
      _
  $region6: #{decoder_rnnt_forward.1} parent=0 // loop_footer
    %s14 = sadd.s32 1, %s10
  $region7: #{decoder_rnnt_forward.1} parent=0 // loop_footer_branch
    %9 = sbr.rel target = $region3
  $region8: #{decoder_rnnt_forward.1} parent=0 // loop_exit
    _

</llo_original>
